<compile_context>
chip_gen: v7x
topology: tpu7x:2x2x1
jax: 0.10.0
libtpu: 0.0.40
codegen_flags: <defaults>
</compile_context>

<pallas_src>
import jax
import jax.numpy as jnp
from jax.experimental import pallas as pl
from jax.experimental.pallas import tpu as pltpu

_LANES = 128  # padded output width of every layer


def _round_up(x, m):
    return (x + m - 1) // m * m


# ----------------------------------------------------------------------------
# Pallas kernel: fused 6-layer MLP on one (TB, .) batch tile
# ----------------------------------------------------------------------------
def _make_kernel(row_offsets, num_layers):
    """Build a kernel with the per-layer weight-slab row offsets baked in."""

    def kernel(x_ref, w_ref, b_ref, o_ref):
        h = x_ref[...]
        for l in range(num_layers):
            r0 = row_offsets[l]
            rows = row_offsets[l + 1] - r0
            w = w_ref[pl.ds(r0, rows), :]            # static, sublane-aligned view
            b = b_ref[l]                             # (1, 128), f32
            # bf16 operands into the MXU, f32 accumulation.
            acc = jnp.dot(h.astype(w_ref.dtype), w,
                          preferred_element_type=jnp.float32) + b
            h = jnp.tanh(acc) if l < num_layers - 1 else acc
        o_ref[...] = h.astype(o_ref.dtype)

    return kernel


# ----------------------------------------------------------------------------
# Wrapper: pack params, pad batch, launch the batch-tiled pallas_call
# ----------------------------------------------------------------------------
def evolution_net_forward(x, params, *, block_b=256,
                          param_dtype=jnp.bfloat16, out_dtype=jnp.float32):
    """Fused EvolutionNet forward.

    x:       (B, num_inputs) float32
    params:  list of (W, b) with W: (in, out), b: (1, out) or (out,), float32
    returns: (B, action_n) out_dtype
    """
    assert block_b % 8 == 0, "batch tile must be a multiple of 8 sublanes"
    B, d_in = x.shape
    num_layers = len(params)
    action_n = params[-1][0].shape[1]
    assert all(w.shape[1] <= _LANES for w, _ in params), "layer width > 128 lanes"

    # ---- pack weights/biases into tile-aligned, 128-lane slabs --------------
    in_pad = _round_up(d_in, _LANES)               # lane-dense input loads
    w_blocks, b_rows, row_offsets = [], [], [0]
    for l, (w, b) in enumerate(params):
        li, lo = w.shape
        rows = in_pad if l == 0 else _LANES
        wb = jnp.zeros((rows, _LANES), jnp.float32).at[:li, :lo].set(
            w.astype(jnp.float32))
        bb = jnp.zeros((1, _LANES), jnp.float32).at[:, :lo].set(
            jnp.asarray(b, jnp.float32).reshape(1, lo))
        w_blocks.append(wb)
        b_rows.append(bb)
        row_offsets.append(row_offsets[-1] + rows)
    # bf16 weights: ~2x less VMEM/DMA and native MXU rate; biases + acc stay f32.
    w_slab = jnp.concatenate(w_blocks, axis=0).astype(param_dtype)
    b_slab = jnp.stack(b_rows, axis=0)                    # (L, 1, 128) float32
    row_offsets = tuple(row_offsets)

    # ---- pad the batch to a whole number of tiles ----------------------------
    tb = min(block_b, _round_up(B, 8))
    b_pad = _round_up(B, tb)
    x_pad = jnp.zeros((b_pad, in_pad), jnp.float32).at[:B, :d_in].set(
        x.astype(jnp.float32))
    grid = (b_pad // tb,)

    flops = 2 * b_pad * (in_pad * _LANES + (num_layers - 1) * _LANES * _LANES)
    transcendentals = (num_layers - 1) * b_pad * _LANES
    bytes_accessed = (x_pad.size * x_pad.dtype.itemsize
                      + w_slab.size * w_slab.dtype.itemsize
                      + b_slab.size * 4
                      + b_pad * _LANES * jnp.dtype(out_dtype).itemsize)

    out_pad = pl.pallas_call(
        _make_kernel(row_offsets, num_layers),
        out_shape=jax.ShapeDtypeStruct((b_pad, _LANES), out_dtype),
        grid=grid,
        in_specs=[
            pl.BlockSpec((tb, in_pad), lambda i: (i, 0)),         # batch tile of x
            pl.BlockSpec(w_slab.shape, lambda i: (0, 0)),         # resident weights
            pl.BlockSpec(b_slab.shape, lambda i: (0, 0, 0)),      # resident biases
        ],
        out_specs=pl.BlockSpec((tb, _LANES), lambda i: (i, 0)),   # lane-dense out
        compiler_params=pltpu.CompilerParams(
            dimension_semantics=("parallel",)),
        cost_estimate=pl.CostEstimate(
            flops=flops,
            transcendentals=transcendentals,
            bytes_accessed=bytes_accessed),
    )(x_pad, w_slab, b_slab)

    return out_pad[:B, :action_n]


# ----------------------------------------------------------------------------
# Deterministic parameter construction (shapes from EvolutionNet.__init__)
# ----------------------------------------------------------------------------
def make_params(key, num_inputs, action_n):
    # Layer sizes: num_inputs -> 64 -> 32 -> 32 -> 16 -> 8 -> action_n
    dims = [num_inputs, 64, 32, 32, 16, 8, action_n]
    params = []
    for i in range(len(dims) - 1):
        key, kw, kb = jax.random.split(key, 3)
        fan_in, fan_out = dims[i], dims[i + 1]
        # The PyTorch module's weights_init zeroes everything; use nonzero
        # values so the kernel is actually exercised.
        w = jax.random.normal(kw, (fan_in, fan_out), jnp.float32) * 0.1
        b = jax.random.normal(kb, (1, fan_out), jnp.float32) * 0.1
        params.append((w, b))
    return params


def reference_forward(x, params, param_dtype=jnp.float32):
    """Pure-JAX reference; param_dtype=bf16 mirrors the kernel's casting."""
    h = x.astype(jnp.float32)
    for i, (w, b) in enumerate(params):
        wq = w.astype(param_dtype)
        acc = jnp.dot(h.astype(param_dtype), wq,
                      preferred_element_type=jnp.float32)
        acc = acc + jnp.asarray(b, jnp.float32).reshape(1, -1)
        h = jnp.tanh(acc) if i < len(params) - 1 else acc
    return h


if __name__ == "__main__":
    key = jax.random.PRNGKey(0)
    k_x, k_p = jax.random.split(key)

    # Population-level batching: evaluate population * env_batch states in ONE
    # pallas_call (shared weights).
    population = 64
    env_batch = 8
    batch = population * env_batch          # 512 rows
    num_inputs = 32
    action_n = 6                            # stand-in for action_space.n

    x = jax.random.normal(k_x, (batch, num_inputs), jnp.float32)
    params = make_params(k_p, num_inputs, action_n)

    # block_b=256 -> grid=(2,): one fat tile per v7x TC, two cheap serial
    # steps on v5e/v6e.  For much larger populations raise block_b to 512+.
    fwd = jax.jit(lambda xx, pp: evolution_net_forward(
        xx, pp, block_b=256, param_dtype=jnp.bfloat16))
    out = jax.block_until_ready(fwd(x, params))

    assert out.shape == (batch, action_n)

    # Tight check against a bf16-weight-matched reference ...
    ref_bf16 = reference_forward(x, params, jnp.bfloat16)
    assert jnp.allclose(out, ref_bf16, atol=5e-3, rtol=5e-3), \
        "mismatch vs bf16-matched reference"
    # ... and a loose sanity check against the exact f32 reference.
    ref_f32 = reference_forward(x, params, jnp.float32)
    assert jnp.allclose(out, ref_f32, atol=5e-2, rtol=5e-2), \
        "mismatch vs f32 reference (bf16 rounding blew up unexpectedly)"

    print("KERNEL_OK")
</pallas_src>

<mosaic_0001>
module attributes {stable_mosaic.version = 11 : i64} {
  func.func @kernel(%arg0: i32, %arg1: memref<256x128xf32, #tpu.memory_space<vmem>>, %arg2: memref<768x128xbf16, #tpu.memory_space<vmem>>, %arg3: memref<6x1x128xf32, #tpu.memory_space<vmem>>, %arg4: memref<256x128xf32, #tpu.memory_space<vmem>>) attributes {dimension_semantics = [#tpu.dimension_semantics<parallel>], iteration_bounds = array<i64: 2>, scalar_prefetch = 0 : i64, scratch_operands = 0 : i64, tpu.core_type = #tpu.core_type<tc>, window_params = [{transform_indices = @transform_0, window_bounds = array<i64: 256, 128>}, {pipeline_mode = #tpu.pipeline_mode<synchronous>, transform_indices = @transform_1, window_bounds = array<i64: 768, 128>}, {pipeline_mode = #tpu.pipeline_mode<synchronous>, transform_indices = @transform_2, window_bounds = array<i64: 6, 1, 128>}, {transform_indices = @transform_3, window_bounds = array<i64: 256, 128>}]} {
    %c0 = arith.constant 0 : index
    %c0_0 = arith.constant 0 : index
    %0 = vector.load %arg1[%c0, %c0_0] : memref<256x128xf32, #tpu.memory_space<vmem>>, vector<256x128xf32>
    %c0_1 = arith.constant 0 : index
    %c0_2 = arith.constant 0 : index
    %1 = vector.load %arg2[%c0_1, %c0_2] : memref<768x128xbf16, #tpu.memory_space<vmem>>, vector<128x128xbf16>
    %c0_3 = arith.constant 0 : index
    %c0_4 = arith.constant 0 : index
    %c0_5 = arith.constant 0 : index
    %2 = vector.load %arg3[%c0_3, %c0_4, %c0_5] : memref<6x1x128xf32, #tpu.memory_space<vmem>>, vector<1x1x128xf32>
    %3 = vector.shape_cast %2 : vector<1x1x128xf32> to vector<1x128xf32>
    %4 = arith.truncf %0 : vector<256x128xf32> to vector<256x128xbf16>
    %cst = arith.constant dense<0.000000e+00> : vector<256x128xf32>
    %5 = tpu.matmul %4, %1, %cst {dimension_numbers = #tpu.dot_dimension_numbers<[1], [0], [0], [1], [0, 0, 1, 1], [], []>} : vector<256x128xbf16>, vector<128x128xbf16>, vector<256x128xf32> -> vector<256x128xf32>
    %6 = vector.broadcast %3 : vector<1x128xf32> to vector<256x128xf32>
    %7 = arith.addf %5, %6 : vector<256x128xf32>
    %8 = math.tanh %7 : vector<256x128xf32>
    %c128 = arith.constant 128 : index
    %c0_6 = arith.constant 0 : index
    %9 = vector.load %arg2[%c128, %c0_6] : memref<768x128xbf16, #tpu.memory_space<vmem>>, vector<128x128xbf16>
    %c1 = arith.constant 1 : index
    %c0_7 = arith.constant 0 : index
    %c0_8 = arith.constant 0 : index
    %10 = vector.load %arg3[%c1, %c0_7, %c0_8] : memref<6x1x128xf32, #tpu.memory_space<vmem>>, vector<1x1x128xf32>
    %11 = vector.shape_cast %10 : vector<1x1x128xf32> to vector<1x128xf32>
    %12 = arith.truncf %8 : vector<256x128xf32> to vector<256x128xbf16>
    %cst_9 = arith.constant dense<0.000000e+00> : vector<256x128xf32>
    %13 = tpu.matmul %12, %9, %cst_9 {dimension_numbers = #tpu.dot_dimension_numbers<[1], [0], [0], [1], [0, 0, 1, 1], [], []>} : vector<256x128xbf16>, vector<128x128xbf16>, vector<256x128xf32> -> vector<256x128xf32>
    %14 = vector.broadcast %11 : vector<1x128xf32> to vector<256x128xf32>
    %15 = arith.addf %13, %14 : vector<256x128xf32>
    %16 = math.tanh %15 : vector<256x128xf32>
    %c256 = arith.constant 256 : index
    %c0_10 = arith.constant 0 : index
    %17 = vector.load %arg2[%c256, %c0_10] : memref<768x128xbf16, #tpu.memory_space<vmem>>, vector<128x128xbf16>
    %c2 = arith.constant 2 : index
    %c0_11 = arith.constant 0 : index
    %c0_12 = arith.constant 0 : index
    %18 = vector.load %arg3[%c2, %c0_11, %c0_12] : memref<6x1x128xf32, #tpu.memory_space<vmem>>, vector<1x1x128xf32>
    %19 = vector.shape_cast %18 : vector<1x1x128xf32> to vector<1x128xf32>
    %20 = arith.truncf %16 : vector<256x128xf32> to vector<256x128xbf16>
    %cst_13 = arith.constant dense<0.000000e+00> : vector<256x128xf32>
    %21 = tpu.matmul %20, %17, %cst_13 {dimension_numbers = #tpu.dot_dimension_numbers<[1], [0], [0], [1], [0, 0, 1, 1], [], []>} : vector<256x128xbf16>, vector<128x128xbf16>, vector<256x128xf32> -> vector<256x128xf32>
    %22 = vector.broadcast %19 : vector<1x128xf32> to vector<256x128xf32>
    %23 = arith.addf %21, %22 : vector<256x128xf32>
    %24 = math.tanh %23 : vector<256x128xf32>
    %c384 = arith.constant 384 : index
    %c0_14 = arith.constant 0 : index
    %25 = vector.load %arg2[%c384, %c0_14] : memref<768x128xbf16, #tpu.memory_space<vmem>>, vector<128x128xbf16>
    %c3 = arith.constant 3 : index
    %c0_15 = arith.constant 0 : index
    %c0_16 = arith.constant 0 : index
    %26 = vector.load %arg3[%c3, %c0_15, %c0_16] : memref<6x1x128xf32, #tpu.memory_space<vmem>>, vector<1x1x128xf32>
    %27 = vector.shape_cast %26 : vector<1x1x128xf32> to vector<1x128xf32>
    %28 = arith.truncf %24 : vector<256x128xf32> to vector<256x128xbf16>
    %cst_17 = arith.constant dense<0.000000e+00> : vector<256x128xf32>
    %29 = tpu.matmul %28, %25, %cst_17 {dimension_numbers = #tpu.dot_dimension_numbers<[1], [0], [0], [1], [0, 0, 1, 1], [], []>} : vector<256x128xbf16>, vector<128x128xbf16>, vector<256x128xf32> -> vector<256x128xf32>
    %30 = vector.broadcast %27 : vector<1x128xf32> to vector<256x128xf32>
    %31 = arith.addf %29, %30 : vector<256x128xf32>
    %32 = math.tanh %31 : vector<256x128xf32>
    %c512 = arith.constant 512 : index
    %c0_18 = arith.constant 0 : index
    %33 = vector.load %arg2[%c512, %c0_18] : memref<768x128xbf16, #tpu.memory_space<vmem>>, vector<128x128xbf16>
    %c4 = arith.constant 4 : index
    %c0_19 = arith.constant 0 : index
    %c0_20 = arith.constant 0 : index
    %34 = vector.load %arg3[%c4, %c0_19, %c0_20] : memref<6x1x128xf32, #tpu.memory_space<vmem>>, vector<1x1x128xf32>
    %35 = vector.shape_cast %34 : vector<1x1x128xf32> to vector<1x128xf32>
    %36 = arith.truncf %32 : vector<256x128xf32> to vector<256x128xbf16>
    %cst_21 = arith.constant dense<0.000000e+00> : vector<256x128xf32>
    %37 = tpu.matmul %36, %33, %cst_21 {dimension_numbers = #tpu.dot_dimension_numbers<[1], [0], [0], [1], [0, 0, 1, 1], [], []>} : vector<256x128xbf16>, vector<128x128xbf16>, vector<256x128xf32> -> vector<256x128xf32>
    %38 = vector.broadcast %35 : vector<1x128xf32> to vector<256x128xf32>
    %39 = arith.addf %37, %38 : vector<256x128xf32>
    %40 = math.tanh %39 : vector<256x128xf32>
    %c640 = arith.constant 640 : index
    %c0_22 = arith.constant 0 : index
    %41 = vector.load %arg2[%c640, %c0_22] : memref<768x128xbf16, #tpu.memory_space<vmem>>, vector<128x128xbf16>
    %c5 = arith.constant 5 : index
    %c0_23 = arith.constant 0 : index
    %c0_24 = arith.constant 0 : index
    %42 = vector.load %arg3[%c5, %c0_23, %c0_24] : memref<6x1x128xf32, #tpu.memory_space<vmem>>, vector<1x1x128xf32>
    %43 = vector.shape_cast %42 : vector<1x1x128xf32> to vector<1x128xf32>
    %44 = arith.truncf %40 : vector<256x128xf32> to vector<256x128xbf16>
    %cst_25 = arith.constant dense<0.000000e+00> : vector<256x128xf32>
    %45 = tpu.matmul %44, %41, %cst_25 {dimension_numbers = #tpu.dot_dimension_numbers<[1], [0], [0], [1], [0, 0, 1, 1], [], []>} : vector<256x128xbf16>, vector<128x128xbf16>, vector<256x128xf32> -> vector<256x128xf32>
    %46 = vector.broadcast %43 : vector<1x128xf32> to vector<256x128xf32>
    %47 = arith.addf %45, %46 : vector<256x128xf32>
    %c0_26 = arith.constant 0 : index
    %c0_27 = arith.constant 0 : index
    %48 = vector.load %arg4[%c0_26, %c0_27] : memref<256x128xf32, #tpu.memory_space<vmem>>, vector<256x128xf32>
    tpu.vector_store %arg4[%c0_26, %c0_27], %47 {strides = array<i32>} : memref<256x128xf32, #tpu.memory_space<vmem>>, vector<256x128xf32>,
    return
  }
  func.func @transform_0(%arg0: i32) -> (i32, i32) {
    %c0_i32 = arith.constant 0 : i32
    %c0_i32_0 = arith.constant 0 : i32
    return %arg0, %c0_i32 : i32, i32
  }
  func.func @transform_1(%arg0: i32) -> (i32, i32) {
    %c0_i32 = arith.constant 0 : i32
    %c0_i32_0 = arith.constant 0 : i32
    %c0_i32_1 = arith.constant 0 : i32
    return %c0_i32, %c0_i32_0 : i32, i32
  }
  func.func @transform_2(%arg0: i32) -> (i32, i32, i32) {
    %c0_i32 = arith.constant 0 : i32
    %c0_i32_0 = arith.constant 0 : i32
    %c0_i32_1 = arith.constant 0 : i32
    %c0_i32_2 = arith.constant 0 : i32
    return %c0_i32, %c0_i32_0, %c0_i32_1 : i32, i32, i32
  }
  func.func @transform_3(%arg0: i32) -> (i32, i32) {
    %c0_i32 = arith.constant 0 : i32
    %c0_i32_0 = arith.constant 0 : i32
    return %arg0, %c0_i32 : i32, i32
  }
}

</mosaic_0001>

<llo_original>
// kernel: _lambda_.1
$region0: #{_lambda_.1}
  #allocation0 [shape = 'u32[]', space=smem, size = 0x4, offset = 0x4, fixed_abs, tag = 'smem constant byte address 0x4 - core index']
  #allocation1 [shape = 'u32[144,128]{1,0:T(1,128)}', space=vmem, size = 0x12000, scoped, tag = 'internal scratch']
  %s0 = inlined_call_operand.vmem [shape: f32[512,128], index: 0, kind: input, shape index: {}]
  %s1 = inlined_call_operand.vmem [shape: bf16[768,128], index: 1, kind: input, shape index: {}]
  %s2 = inlined_call_operand.vmem [shape: f32[6,1,128], index: 2, kind: input, shape index: {}]
  %s3 = inlined_call_operand.vmem [shape: f32[512,128], index: 3, kind: output, shape index: {}]
  %s4 = sld [smem:[#allocation0]]
  $region45: #{_lambda_.1} parent=0
    _
  %s6 = ssub.s32 1, %s4
  %s7 = scalar_select 0, %s6, %s4
  loop: start=0, step=1, limit=4
  $region2: #{_lambda_.1} parent=0 // loop_pre_header
    _
  $region3: #{_lambda_.1} parent=0 // loop_header
    %s9 = sphi 0, %s13
    %p10 = scmp.ge.s32.totalorder %s9, 4
    %s19 = sphi 0, %s21
    %s22 = sphi 0, %s19
    %s23 = sphi 0, %s22
    %s39 = sphi 0, %s23
    %s43 = sphi 0, %s43
    %s45 = sphi 0, %s43
    %s46 = sphi 0, %s45
    %s60 = sphi 0, %s46
    %s64 = sphi 0, %s64
    %s66 = sphi 0, %s64
    %s67 = sphi 0, %s66
    %s81 = sphi 0, %s67
    %s87 = sphi 0, %s89
    %s90 = sphi 0, %s87
    %s91 = sphi 0, %s90
    %s107 = sphi 0, %s91
  $region4: #{_lambda_.1} parent=0 // loop_header_branch
    %12 = sbr.rel (%p10) target = $region8
  $region5: #{_lambda_.1} parent=0 // loop_body
    %s14 = ssub.s32 %s9, 1
    %s15 = ssub.s32 %s9, 2
    %s16 = sadd.s32 %s9, 1
    %s17 = ssub.s32 %s9, %s16
    %p18 = scmp.eq.s32.totalorder %s17, 0
    %s20 = sadd.s32 %s19, 1
    %s21 = scalar_select %p18, %s19, %s20
    %p24 = pneg %p18
    %p25 = scmp.eq.s32.totalorder %s9, 1
    %p26 = por %p24, %p25
    %p27 = scmp.ne.s32.totalorder %s19, %s22
    %p28 = scmp.eq.s32.totalorder %s9, 0
    %p29 = por %p27, %p28
    %p30 = scmp.ne.s32.totalorder %s19, %s22
    %p31 = scmp.eq.s32.totalorder %s14, 1
    %p32 = por %p30, %p31
    %p33 = scmp.ne.s32.totalorder %s22, %s23
    %p34 = scmp.eq.s32.totalorder %s14, 0
    %p35 = por %p33, %p34
    %p36 = scmp.ne.s32.totalorder %s22, %s23
    %p37 = scmp.eq.s32.totalorder %s15, 1
    %p38 = por %p36, %p37
    %p40 = scmp.ne.s32.totalorder %s23, %s39
    %p41 = scmp.eq.s32.totalorder %s15, 0
    %p42 = por %p40, %p41
    %s44 = sadd.s32 %s43, 1
    %p47 = scmp.eq.s32.totalorder %s9, 1
    %p48 = scmp.ne.s32.totalorder %s43, %s45
    %p49 = scmp.eq.s32.totalorder %s9, 0
    %p50 = por %p48, %p49
    %p51 = scmp.ne.s32.totalorder %s43, %s45
    %p52 = scmp.eq.s32.totalorder %s14, 1
    %p53 = por %p51, %p52
    %p54 = scmp.ne.s32.totalorder %s45, %s46
    %p55 = scmp.eq.s32.totalorder %s14, 0
    %p56 = por %p54, %p55
    %p57 = scmp.ne.s32.totalorder %s45, %s46
    %p58 = scmp.eq.s32.totalorder %s15, 1
    %p59 = por %p57, %p58
    %p61 = scmp.ne.s32.totalorder %s46, %s60
    %p62 = scmp.eq.s32.totalorder %s15, 0
    %p63 = por %p61, %p62
    %s65 = sadd.s32 %s64, 1
    %p68 = scmp.eq.s32.totalorder %s9, 1
    %p69 = scmp.ne.s32.totalorder %s64, %s66
    %p70 = scmp.eq.s32.totalorder %s9, 0
    %p71 = por %p69, %p70
    %p72 = scmp.ne.s32.totalorder %s64, %s66
    %p73 = scmp.eq.s32.totalorder %s14, 1
    %p74 = por %p72, %p73
    %p75 = scmp.ne.s32.totalorder %s66, %s67
    %p76 = scmp.eq.s32.totalorder %s14, 0
    %p77 = por %p75, %p76
    %p78 = scmp.ne.s32.totalorder %s66, %s67
    %p79 = scmp.eq.s32.totalorder %s15, 1
    %p80 = por %p78, %p79
    %p82 = scmp.ne.s32.totalorder %s67, %s81
    %p83 = scmp.eq.s32.totalorder %s15, 0
    %p84 = por %p82, %p83
    %s85 = ssub.s32 %s9, %s16
    %p86 = scmp.eq.s32.totalorder %s85, 0
    %s88 = sadd.s32 %s87, 1
    %s89 = scalar_select %p86, %s87, %s88
    %p92 = pneg %p86
    %p93 = scmp.eq.s32.totalorder %s9, 1
    %p94 = por %p92, %p93
    %p95 = scmp.ne.s32.totalorder %s87, %s90
    %p96 = scmp.eq.s32.totalorder %s9, 0
    %p97 = por %p95, %p96
    %p98 = scmp.ne.s32.totalorder %s87, %s90
    %p99 = scmp.eq.s32.totalorder %s14, 1
    %p100 = por %p98, %p99
    %p101 = scmp.ne.s32.totalorder %s90, %s91
    %p102 = scmp.eq.s32.totalorder %s14, 0
    %p103 = por %p101, %p102
    %p104 = scmp.ne.s32.totalorder %s90, %s91
    %p105 = scmp.eq.s32.totalorder %s15, 1
    %p106 = por %p104, %p105
    %p108 = scmp.ne.s32.totalorder %s91, %s107
    %p109 = scmp.eq.s32.totalorder %s15, 0
    %p110 = por %p108, %p109
    %p111 = scmp.le.s32.totalorder 1, %s9
    %p112 = scmp.lt.s32.totalorder %s9, 3
    %p113 = pnand %p111, %p112
    %p114 = pneg %p113
    // Predicated region
    $region9: #{_lambda_.1} parent=5 // pred_check
      _
    $region10: #{_lambda_.1} parent=5 // pred_check_branch
      %116 = sbr.rel (%p113) target = $region12
    $region11: #{_lambda_.1} parent=5 // pred_region
      %s117 = ssub.s32 %s9, 1
      // Predicated region
      $region13: #{_lambda_.1} parent=11 // pred_check
        %p118 = pneg %p56
      $region14: #{_lambda_.1} parent=11 // pred_check_branch
        %120 = sbr.rel (%p118) target = $region16
      $region15: #{_lambda_.1} parent=11 // pred_region
        _
      $region16: #{_lambda_.1} parent=11 // pred_fallthru
        _
      // Predicated region
      $region17: #{_lambda_.1} parent=11 // pred_check
        %p121 = pneg %p77
      $region18: #{_lambda_.1} parent=11 // pred_check_branch
        %123 = sbr.rel (%p121) target = $region20
      $region19: #{_lambda_.1} parent=11 // pred_region
        _
      $region20: #{_lambda_.1} parent=11 // pred_fallthru
        _
    $region12: #{_lambda_.1} parent=5 // pred_fallthru
      _
    %p124 = scmp.lt.s32.totalorder %s9, 2
    // Predicated region
    $region21: #{_lambda_.1} parent=5 // pred_check
      %p125 = pneg %p124
    $region22: #{_lambda_.1} parent=5 // pred_check_branch
      %127 = sbr.rel (%p125) target = $region24
    $region23: #{_lambda_.1} parent=5 // pred_region
      // Predicated region
      $region25: #{_lambda_.1} parent=23 // pred_check
        %p128 = pneg %p29
      $region26: #{_lambda_.1} parent=23 // pred_check_branch
        %130 = sbr.rel (%p128) target = $region28
      $region27: #{_lambda_.1} parent=23 // pred_region
        %s131 = smul.u32 32, %s9
        %p132 = scmp.lt.s32.totalorder %s131, 63
        %s133 = scalar_select %p132, %s131, 63
        %s134 = smul.addr %s133, 8
        %s135 = scalar_lea.vmem %s0, %s134
        %s136 = smul.u32 32, %s9
      $region28: #{_lambda_.1} parent=23 // pred_fallthru
        _
    $region24: #{_lambda_.1} parent=5 // pred_fallthru
      _
    %p137 = scmp.le.s32.totalorder 1, %s9
    %p138 = scmp.lt.s32.totalorder %s9, 3
    %p139 = pnand %p137, %p138
    %p140 = pneg %p139
    // Predicated region
    $region29: #{_lambda_.1} parent=5 // pred_check
      _
    $region30: #{_lambda_.1} parent=5 // pred_check_branch
      %142 = sbr.rel (%p139) target = $region32
    $region31: #{_lambda_.1} parent=5 // pred_region
      %s143 = ssub.s32 %s9, 1
      %s144 = smul.u32 32, %s14
      %p145 = scmp.lt.s32.totalorder %s144, 63
      %s146 = scalar_select %p145, %s144, 63
      %s147 = smul.addr %s146, 8
      %s148 = scalar_lea.vmem %s0, %s147
      %p149 = pneg %p35
      %p150 = pneg %p32
      %p151 = pneg %p56
      %p152 = pneg %p53
      %p153 = pneg %p77
      %p154 = pneg %p74
      %p155 = pneg %p103
      %p156 = pneg %p100
      %s157 = smul.u32 32, %s14
      %p158 = scmp.lt.s32.totalorder %s157, 63
      %s159 = scalar_select %p158, %s157, 63
      %s160 = smul.addr %s159, 8
      %s161 = scalar_lea.vmem %s3, %s160
      %s162 = smul.u32 32, %s14
      %p163 = scmp.lt.s32.totalorder %s162, 63
      %s164 = scalar_select %p163, %s162, 63
      %s165 = smul.addr %s164, 8
      %s166 = scalar_lea.vmem %s0, %s165
      %s167 = smul.u32 32, %s14
      %s168 = smul.u32 32, %s14
      %p169 = scmp.lt.s32.totalorder %s168, 63
      %s170 = scalar_select %p169, %s168, 63
      %s171 = smul.addr %s170, 8
      %s172 = scalar_lea.vmem %s3, %s171
      %s173 = smul.u32 32, %s14
      %v175 = vld [vmem:[%s166] sm:$0xff]
      %v176 = vld [vmem:[%s166 + $0x8] sm:$0xff]
      %v177 = vld [vmem:[%s166 + $0x10] sm:$0xff]
      %v178 = vld [vmem:[%s166 + $0x18] sm:$0xff]
      %v179 = vld [vmem:[%s166 + $0x20] sm:$0xff]
      %v180 = vld [vmem:[%s166 + $0x28] sm:$0xff]
      %v181 = vld [vmem:[%s166 + $0x30] sm:$0xff]
      %v182 = vld [vmem:[%s166 + $0x38] sm:$0xff]
      %v183 = vld [vmem:[%s166 + $0x40] sm:$0xff]
      %v184 = vld [vmem:[%s166 + $0x48] sm:$0xff]
      %v185 = vld [vmem:[%s166 + $0x50] sm:$0xff]
      %v186 = vld [vmem:[%s166 + $0x58] sm:$0xff]
      %v187 = vld [vmem:[%s166 + $0x60] sm:$0xff]
      %v188 = vld [vmem:[%s166 + $0x68] sm:$0xff]
      %v189 = vld [vmem:[%s166 + $0x70] sm:$0xff]
      %v190 = vld [vmem:[%s166 + $0x78] sm:$0xff]
      %v191 = vld [vmem:[%s166 + $0x80] sm:$0xff]
      %v192 = vld [vmem:[%s166 + $0x88] sm:$0xff]
      %v193 = vld [vmem:[%s166 + $0x90] sm:$0xff]
      %v194 = vld [vmem:[%s166 + $0x98] sm:$0xff]
      %v195 = vld [vmem:[%s166 + $0xa0] sm:$0xff]
      %v196 = vld [vmem:[%s166 + $0xa8] sm:$0xff]
      %v197 = vld [vmem:[%s166 + $0xb0] sm:$0xff]
      %v198 = vld [vmem:[%s166 + $0xb8] sm:$0xff]
      %v199 = vld [vmem:[%s166 + $0xc0] sm:$0xff]
      %v200 = vld [vmem:[%s166 + $0xc8] sm:$0xff]
      %v201 = vld [vmem:[%s166 + $0xd0] sm:$0xff]
      %v202 = vld [vmem:[%s166 + $0xd8] sm:$0xff]
      %v203 = vld [vmem:[%s166 + $0xe0] sm:$0xff]
      %v204 = vld [vmem:[%s166 + $0xe8] sm:$0xff]
      %v205 = vld [vmem:[%s166 + $0xf0] sm:$0xff]
      %v206 = vld [vmem:[%s166 + $0xf8] sm:$0xff]
      %v207 = vld [vmem:[%s1] sm:$0xf]
      %v208 = vld [vmem:[%s1 + $0x4] sm:$0xf]
      %v209 = vld [vmem:[%s1 + $0x8] sm:$0xf]
      %v210 = vld [vmem:[%s1 + $0xc] sm:$0xf]
      %v211 = vld [vmem:[%s1 + $0x10] sm:$0xf]
      %v212 = vld [vmem:[%s1 + $0x14] sm:$0xf]
      %v213 = vld [vmem:[%s1 + $0x18] sm:$0xf]
      %v214 = vld [vmem:[%s1 + $0x1c] sm:$0xf]
      %v215 = vld [vmem:[%s1 + $0x20] sm:$0xf]
      %v216 = vld [vmem:[%s1 + $0x24] sm:$0xf]
      %v217 = vld [vmem:[%s1 + $0x28] sm:$0xf]
      %v218 = vld [vmem:[%s1 + $0x2c] sm:$0xf]
      %v219 = vld [vmem:[%s1 + $0x30] sm:$0xf]
      %v220 = vld [vmem:[%s1 + $0x34] sm:$0xf]
      %v221 = vld [vmem:[%s1 + $0x38] sm:$0xf]
      %v222 = vld [vmem:[%s1 + $0x3c] sm:$0xf]
      %v223 = vld [vmem:[%s2] sm:$0x1]
      %v224 = vpack.c.bf16 %v176, %v175
      %v225 = vpack.c.bf16 %v178, %v177
      %v226 = vpack.c.bf16 %v180, %v179
      %v227 = vpack.c.bf16 %v182, %v181
      %v228 = vpack.c.bf16 %v184, %v183
      %v229 = vpack.c.bf16 %v186, %v185
      %v230 = vpack.c.bf16 %v188, %v187
      %v231 = vpack.c.bf16 %v190, %v189
      %v232 = vpack.c.bf16 %v192, %v191
      %v233 = vpack.c.bf16 %v194, %v193
      %v234 = vpack.c.bf16 %v196, %v195
      %v235 = vpack.c.bf16 %v198, %v197
      %v236 = vpack.c.bf16 %v200, %v199
      %v237 = vpack.c.bf16 %v202, %v201
      %v238 = vpack.c.bf16 %v204, %v203
      %v239 = vpack.c.bf16 %v206, %v205
      %v241 = vlaneseq
      %v242 = vshrl.u32 %v241, 7
      %v243 = vsub.s32 0, %v242
      %v244 = vrot.slane %v223, %v243
      %v262 = vunpack.c.l.b16 %v207
      %v263 = vunpack.c.l.b16 %v208
      %v264 = vunpack.c.l.b16 %v209
      %v265 = vunpack.c.l.b16 %v210
      %v266 = vunpack.c.l.b16 %v211
      %v267 = vunpack.c.l.b16 %v212
      %v268 = vunpack.c.l.b16 %v213
      %v269 = vunpack.c.l.b16 %v214
      %v270 = vunpack.c.l.b16 %v215
      %v271 = vunpack.c.l.b16 %v216
      %v272 = vunpack.c.l.b16 %v217
      %v273 = vunpack.c.l.b16 %v218
      %v274 = vunpack.c.l.b16 %v219
      %v275 = vunpack.c.l.b16 %v220
      %v276 = vunpack.c.l.b16 %v221
      %v277 = vunpack.c.l.b16 %v222
      %v278 = vpack.c.b16 %v263, %v262
      %v279 = vpack.c.b16 %v265, %v264
      %v280 = vpack.c.b16 %v267, %v266
      %v281 = vpack.c.b16 %v269, %v268
      %v282 = vpack.c.b16 %v271, %v270
      %v283 = vpack.c.b16 %v273, %v272
      %v284 = vpack.c.b16 %v275, %v274
      %v285 = vpack.c.b16 %v277, %v276
      %294 = vmatprep.subr.bf16.mxu0 0
      %295 = vmatpush1.bf16.msra.mxu0 %v278
      %296 = vmatprep.subr.bf16.mxu0 0
      %297 = vmatpush1.bf16.msra.mxu0 %v279
      %298 = vmatprep.subr.bf16.mxu0 0
      %299 = vmatpush1.bf16.msra.mxu0 %v280
      %300 = vmatprep.subr.bf16.mxu0 0
      %301 = vmatpush1.bf16.msra.mxu0 %v281
      %302 = vmatprep.subr.bf16.mxu0 0
      %303 = vmatpush1.bf16.msra.mxu0 %v282
      %304 = vmatprep.subr.bf16.mxu0 0
      %305 = vmatpush1.bf16.msra.mxu0 %v283
      %306 = vmatprep.subr.bf16.mxu0 0
      %307 = vmatpush1.bf16.msra.mxu0 %v284
      %308 = vmatprep.subr.bf16.mxu0 0
      %309 = vmatpush1.bf16.msra.mxu0 %v285
      %310 = vmatprep.subr.bf16.mxu0 0
      %311 = vmatpush1.bf16.msra.mxu0 0
      %312 = vmatprep.subr.bf16.mxu0 0
      %313 = vmatpush1.bf16.msra.mxu0 0
      %314 = vmatprep.subr.bf16.mxu0 0
      %315 = vmatpush1.bf16.msra.mxu0 0
      %316 = vmatprep.subr.bf16.mxu0 0
      %317 = vmatpush1.bf16.msra.mxu0 0
      %318 = vmatprep.subr.bf16.mxu0 0
      %319 = vmatpush1.bf16.msra.mxu0 0
      %320 = vmatprep.subr.bf16.mxu0 0
      %321 = vmatpush1.bf16.msra.mxu0 0
      %322 = vmatprep.subr.bf16.mxu0 0
      %323 = vmatpush1.bf16.msra.mxu0 0
      %324 = vmatprep.subr.bf16.mxu0 0
      %325 = vmatpush1.bf16.msra.mxu0 0
      %326 = vmatprep.mubr.bf16.mxu0 0
      %327 = vmatmul.mubr.bf16.gmra.mrb[0].mxu0 %v224
      %v328 = vpop.f32.mrb[0].mxu0
      %v329 = vadd.f32 %v244, %v328
      %v330 = vpop.f32.mrb[0].mxu0
      %v331 = vpop.f32.mrb[0].mxu0
      %v332 = vadd.f32 %v244, %v331
      %v333 = vpop.f32.mrb[0].mxu0
      %334 = vmatprep.mubr.bf16.mxu0 0
      %335 = vmatmul.mubr.bf16.gmra.mrb[0].mxu0 %v225
      %v336 = vpop.f32.mrb[0].mxu0
      %v337 = vadd.f32 %v244, %v336
      %v338 = vpop.f32.mrb[0].mxu0
      %v339 = vpop.f32.mrb[0].mxu0
      %v340 = vadd.f32 %v244, %v339
      %v341 = vpop.f32.mrb[0].mxu0
      %342 = vmatprep.mubr.bf16.mxu0 0
      %343 = vmatmul.mubr.bf16.gmra.mrb[0].mxu0 %v226
      %v344 = vpop.f32.mrb[0].mxu0
      %v345 = vadd.f32 %v244, %v344
      %v346 = vpop.f32.mrb[0].mxu0
      %v347 = vpop.f32.mrb[0].mxu0
      %v348 = vadd.f32 %v244, %v347
      %v349 = vpop.f32.mrb[0].mxu0
      %350 = vmatprep.mubr.bf16.mxu0 0
      %351 = vmatmul.mubr.bf16.gmra.mrb[0].mxu0 %v227
      %v352 = vpop.f32.mrb[0].mxu0
      %v353 = vadd.f32 %v244, %v352
      %v354 = vpop.f32.mrb[0].mxu0
      %v355 = vpop.f32.mrb[0].mxu0
      %v356 = vadd.f32 %v244, %v355
      %v357 = vpop.f32.mrb[0].mxu0
      %358 = vmatprep.mubr.bf16.mxu0 0
      %359 = vmatmul.mubr.bf16.gmra.mrb[0].mxu0 %v228
      %v360 = vpop.f32.mrb[0].mxu0
      %v361 = vadd.f32 %v244, %v360
      %v362 = vpop.f32.mrb[0].mxu0
      %v363 = vpop.f32.mrb[0].mxu0
      %v364 = vadd.f32 %v244, %v363
      %v365 = vpop.f32.mrb[0].mxu0
      %366 = vmatprep.mubr.bf16.mxu0 0
      %367 = vmatmul.mubr.bf16.gmra.mrb[0].mxu0 %v229
      %v368 = vpop.f32.mrb[0].mxu0
      %v369 = vadd.f32 %v244, %v368
      %v370 = vpop.f32.mrb[0].mxu0
      %v371 = vpop.f32.mrb[0].mxu0
      %v372 = vadd.f32 %v244, %v371
      %v373 = vpop.f32.mrb[0].mxu0
      %374 = vmatprep.mubr.bf16.mxu0 0
      %375 = vmatmul.mubr.bf16.gmra.mrb[0].mxu0 %v230
      %v376 = vpop.f32.mrb[0].mxu0
      %v377 = vadd.f32 %v244, %v376
      %v378 = vpop.f32.mrb[0].mxu0
      %v379 = vpop.f32.mrb[0].mxu0
      %v380 = vadd.f32 %v244, %v379
      %v381 = vpop.f32.mrb[0].mxu0
      %382 = vmatprep.mubr.bf16.mxu0 0
      %383 = vmatmul.mubr.bf16.gmra.mrb[0].mxu0 %v231
      %v384 = vpop.f32.mrb[0].mxu0
      %v385 = vadd.f32 %v244, %v384
      %v386 = vpop.f32.mrb[0].mxu0
      %v387 = vpop.f32.mrb[0].mxu0
      %v388 = vadd.f32 %v244, %v387
      %v389 = vpop.f32.mrb[0].mxu0
      %390 = vmatprep.mubr.bf16.mxu0 0
      %391 = vmatmul.mubr.bf16.gmra.mrb[0].mxu0 %v232
      %v392 = vpop.f32.mrb[0].mxu0
      %v393 = vadd.f32 %v244, %v392
      %v394 = vpop.f32.mrb[0].mxu0
      %v395 = vpop.f32.mrb[0].mxu0
      %v396 = vadd.f32 %v244, %v395
      %v397 = vpop.f32.mrb[0].mxu0
      %398 = vmatprep.mubr.bf16.mxu0 0
      %399 = vmatmul.mubr.bf16.gmra.mrb[0].mxu0 %v233
      %v400 = vpop.f32.mrb[0].mxu0
      %v401 = vadd.f32 %v244, %v400
      %v402 = vpop.f32.mrb[0].mxu0
      %v403 = vpop.f32.mrb[0].mxu0
      %v404 = vadd.f32 %v244, %v403
      %v405 = vpop.f32.mrb[0].mxu0
      %406 = vmatprep.mubr.bf16.mxu0 0
      %407 = vmatmul.mubr.bf16.gmra.mrb[0].mxu0 %v234
      %v408 = vpop.f32.mrb[0].mxu0
      %v409 = vadd.f32 %v244, %v408
      %v410 = vpop.f32.mrb[0].mxu0
      %v411 = vpop.f32.mrb[0].mxu0
      %v412 = vadd.f32 %v244, %v411
      %v413 = vpop.f32.mrb[0].mxu0
      %414 = vmatprep.mubr.bf16.mxu0 0
      %415 = vmatmul.mubr.bf16.gmra.mrb[0].mxu0 %v235
      %v416 = vpop.f32.mrb[0].mxu0
      %v417 = vadd.f32 %v244, %v416
      %v418 = vpop.f32.mrb[0].mxu0
      %v419 = vpop.f32.mrb[0].mxu0
      %v420 = vadd.f32 %v244, %v419
      %v421 = vpop.f32.mrb[0].mxu0
      %422 = vmatprep.mubr.bf16.mxu0 0
      %423 = vmatmul.mubr.bf16.gmra.mrb[0].mxu0 %v236
      %v424 = vpop.f32.mrb[0].mxu0
      %v425 = vadd.f32 %v244, %v424
      %v426 = vpop.f32.mrb[0].mxu0
      %v427 = vpop.f32.mrb[0].mxu0
      %v428 = vadd.f32 %v244, %v427
      %v429 = vpop.f32.mrb[0].mxu0
      %430 = vmatprep.mubr.bf16.mxu0 0
      %431 = vmatmul.mubr.bf16.gmra.mrb[0].mxu0 %v237
      %v432 = vpop.f32.mrb[0].mxu0
      %v433 = vadd.f32 %v244, %v432
      %v434 = vpop.f32.mrb[0].mxu0
      %v435 = vpop.f32.mrb[0].mxu0
      %v436 = vadd.f32 %v244, %v435
      %v437 = vpop.f32.mrb[0].mxu0
      %438 = vmatprep.mubr.bf16.mxu0 0
      %439 = vmatmul.mubr.bf16.gmra.mrb[0].mxu0 %v238
      %v440 = vpop.f32.mrb[0].mxu0
      %v441 = vadd.f32 %v244, %v440
      %v442 = vpop.f32.mrb[0].mxu0
      %v443 = vpop.f32.mrb[0].mxu0
      %v444 = vadd.f32 %v244, %v443
      %v445 = vpop.f32.mrb[0].mxu0
      %446 = vmatprep.mubr.bf16.mxu0 0
      %447 = vmatmul.mubr.bf16.gmra.mrb[0].mxu0 %v239
      %v448 = vpop.f32.mrb[0].mxu0
      %v449 = vadd.f32 %v244, %v448
      %v450 = vpop.f32.mrb[0].mxu0
      %v451 = vpop.f32.mrb[0].mxu0
      %v452 = vadd.f32 %v244, %v451
      %v453 = vpop.f32.mrb[0].mxu0
      %454 = vdwg.mxu0
      %v455 = vtanh.pop %v329
      %v456 = vtanh.pop %v332
      %v457 = vtanh.pop %v337
      %v458 = vtanh.pop %v340
      %v459 = vtanh.pop %v345
      %v460 = vtanh.pop %v348
      %v461 = vtanh.pop %v353
      %v462 = vtanh.pop %v356
      %v463 = vtanh.pop %v361
      %v464 = vtanh.pop %v364
      %v465 = vtanh.pop %v369
      %v466 = vtanh.pop %v372
      %v467 = vtanh.pop %v377
      %v468 = vtanh.pop %v380
      %v469 = vtanh.pop %v385
      %v470 = vtanh.pop %v388
      %v471 = vtanh.pop %v393
      %v472 = vtanh.pop %v396
      %v473 = vtanh.pop %v401
      %v474 = vtanh.pop %v404
      %v475 = vtanh.pop %v409
      %v476 = vtanh.pop %v412
      %v477 = vtanh.pop %v417
      %v478 = vtanh.pop %v420
      %v479 = vtanh.pop %v425
      %v480 = vtanh.pop %v428
      %v481 = vtanh.pop %v433
      %v482 = vtanh.pop %v436
      %v483 = vtanh.pop %v441
      %v484 = vtanh.pop %v444
      %v485 = vtanh.pop %v449
      %v486 = vtanh.pop %v452
      %v487 = vld [vmem:[%s1 + $0x40] sm:$0xf]
      %v488 = vld [vmem:[%s1 + $0x44] sm:$0xf]
      %v489 = vld [vmem:[%s1 + $0x48] sm:$0xf]
      %v490 = vld [vmem:[%s1 + $0x4c] sm:$0xf]
      %v491 = vld [vmem:[%s1 + $0x50] sm:$0xf]
      %v492 = vld [vmem:[%s1 + $0x54] sm:$0xf]
      %v493 = vld [vmem:[%s1 + $0x58] sm:$0xf]
      %v494 = vld [vmem:[%s1 + $0x5c] sm:$0xf]
      %v495 = vld [vmem:[%s1 + $0x60] sm:$0xf]
      %v496 = vld [vmem:[%s1 + $0x64] sm:$0xf]
      %v497 = vld [vmem:[%s1 + $0x68] sm:$0xf]
      %v498 = vld [vmem:[%s1 + $0x6c] sm:$0xf]
      %v499 = vld [vmem:[%s1 + $0x70] sm:$0xf]
      %v500 = vld [vmem:[%s1 + $0x74] sm:$0xf]
      %v501 = vld [vmem:[%s1 + $0x78] sm:$0xf]
      %v502 = vld [vmem:[%s1 + $0x7c] sm:$0xf]
      %s503 = scalar_lea.vmem %s2, 1
      %v504 = vld [vmem:[%s503] sm:$0x1]
      %v505 = vpack.c.bf16 %v456, %v455
      %v506 = vpack.c.bf16 %v458, %v457
      %v507 = vpack.c.bf16 %v460, %v459
      %v508 = vpack.c.bf16 %v462, %v461
      %v509 = vpack.c.bf16 %v464, %v463
      %v510 = vpack.c.bf16 %v466, %v465
      %v511 = vpack.c.bf16 %v468, %v467
      %v512 = vpack.c.bf16 %v470, %v469
      %v513 = vpack.c.bf16 %v472, %v471
      %v514 = vpack.c.bf16 %v474, %v473
      %v515 = vpack.c.bf16 %v476, %v475
      %v516 = vpack.c.bf16 %v478, %v477
      %v517 = vpack.c.bf16 %v480, %v479
      %v518 = vpack.c.bf16 %v482, %v481
      %v519 = vpack.c.bf16 %v484, %v483
      %v520 = vpack.c.bf16 %v486, %v485
      %v522 = vlaneseq
      %v523 = vshrl.u32 %v522, 7
      %v524 = vsub.s32 0, %v523
      %v525 = vrot.slane %v504, %v524
      %v543 = vunpack.c.l.b16 %v487
      %v544 = vunpack.c.l.b16 %v488
      %v545 = vunpack.c.l.b16 %v489
      %v546 = vunpack.c.l.b16 %v490
      %v547 = vunpack.c.l.b16 %v491
      %v548 = vunpack.c.l.b16 %v492
      %v549 = vunpack.c.l.b16 %v493
      %v550 = vunpack.c.l.b16 %v494
      %v551 = vunpack.c.l.b16 %v495
      %v552 = vunpack.c.l.b16 %v496
      %v553 = vunpack.c.l.b16 %v497
      %v554 = vunpack.c.l.b16 %v498
      %v555 = vunpack.c.l.b16 %v499
      %v556 = vunpack.c.l.b16 %v500
      %v557 = vunpack.c.l.b16 %v501
      %v558 = vunpack.c.l.b16 %v502
      %v559 = vpack.c.b16 %v544, %v543
      %v560 = vpack.c.b16 %v546, %v545
      %v561 = vpack.c.b16 %v548, %v547
      %v562 = vpack.c.b16 %v550, %v549
      %v563 = vpack.c.b16 %v552, %v551
      %v564 = vpack.c.b16 %v554, %v553
      %v565 = vpack.c.b16 %v556, %v555
      %v566 = vpack.c.b16 %v558, %v557
      %575 = vmatprep.subr.bf16.mxu0 0
      %576 = vmatpush1.bf16.msra.mxu0 %v559
      %577 = vmatprep.subr.bf16.mxu0 0
      %578 = vmatpush1.bf16.msra.mxu0 %v560
      %579 = vmatprep.subr.bf16.mxu0 0
      %580 = vmatpush1.bf16.msra.mxu0 %v561
      %581 = vmatprep.subr.bf16.mxu0 0
      %582 = vmatpush1.bf16.msra.mxu0 %v562
      %583 = vmatprep.subr.bf16.mxu0 0
      %584 = vmatpush1.bf16.msra.mxu0 %v563
      %585 = vmatprep.subr.bf16.mxu0 0
      %586 = vmatpush1.bf16.msra.mxu0 %v564
      %587 = vmatprep.subr.bf16.mxu0 0
      %588 = vmatpush1.bf16.msra.mxu0 %v565
      %589 = vmatprep.subr.bf16.mxu0 0
      %590 = vmatpush1.bf16.msra.mxu0 %v566
      %591 = vmatprep.subr.bf16.mxu0 0
      %592 = vmatpush1.bf16.msra.mxu0 0
      %593 = vmatprep.subr.bf16.mxu0 0
      %594 = vmatpush1.bf16.msra.mxu0 0
      %595 = vmatprep.subr.bf16.mxu0 0
      %596 = vmatpush1.bf16.msra.mxu0 0
      %597 = vmatprep.subr.bf16.mxu0 0
      %598 = vmatpush1.bf16.msra.mxu0 0
      %599 = vmatprep.subr.bf16.mxu0 0
      %600 = vmatpush1.bf16.msra.mxu0 0
      %601 = vmatprep.subr.bf16.mxu0 0
      %602 = vmatpush1.bf16.msra.mxu0 0
      %603 = vmatprep.subr.bf16.mxu0 0
      %604 = vmatpush1.bf16.msra.mxu0 0
      %605 = vmatprep.subr.bf16.mxu0 0
      %606 = vmatpush1.bf16.msra.mxu0 0
      %607 = vmatprep.mubr.bf16.mxu0 0
      %608 = vmatmul.mubr.bf16.gmra.mrb[0].mxu0 %v505
      %v609 = vpop.f32.mrb[0].mxu0
      %v610 = vadd.f32 %v525, %v609
      %v611 = vpop.f32.mrb[0].mxu0
      %v612 = vpop.f32.mrb[0].mxu0
      %v613 = vadd.f32 %v525, %v612
      %v614 = vpop.f32.mrb[0].mxu0
      %615 = vmatprep.mubr.bf16.mxu0 0
      %616 = vmatmul.mubr.bf16.gmra.mrb[0].mxu0 %v506
      %v617 = vpop.f32.mrb[0].mxu0
      %v618 = vadd.f32 %v525, %v617
      %v619 = vpop.f32.mrb[0].mxu0
      %v620 = vpop.f32.mrb[0].mxu0
      %v621 = vadd.f32 %v525, %v620
      %v622 = vpop.f32.mrb[0].mxu0
      %623 = vmatprep.mubr.bf16.mxu0 0
      %624 = vmatmul.mubr.bf16.gmra.mrb[0].mxu0 %v507
      %v625 = vpop.f32.mrb[0].mxu0
      %v626 = vadd.f32 %v525, %v625
      %v627 = vpop.f32.mrb[0].mxu0
      %v628 = vpop.f32.mrb[0].mxu0
      %v629 = vadd.f32 %v525, %v628
      %v630 = vpop.f32.mrb[0].mxu0
      %631 = vmatprep.mubr.bf16.mxu0 0
      %632 = vmatmul.mubr.bf16.gmra.mrb[0].mxu0 %v508
      %v633 = vpop.f32.mrb[0].mxu0
      %v634 = vadd.f32 %v525, %v633
      %v635 = vpop.f32.mrb[0].mxu0
      %v636 = vpop.f32.mrb[0].mxu0
      %v637 = vadd.f32 %v525, %v636
      %v638 = vpop.f32.mrb[0].mxu0
      %639 = vmatprep.mubr.bf16.mxu0 0
      %640 = vmatmul.mubr.bf16.gmra.mrb[0].mxu0 %v509
      %v641 = vpop.f32.mrb[0].mxu0
      %v642 = vadd.f32 %v525, %v641
      %v643 = vpop.f32.mrb[0].mxu0
      %v644 = vpop.f32.mrb[0].mxu0
      %v645 = vadd.f32 %v525, %v644
      %v646 = vpop.f32.mrb[0].mxu0
      %647 = vmatprep.mubr.bf16.mxu0 0
      %648 = vmatmul.mubr.bf16.gmra.mrb[0].mxu0 %v510
      %v649 = vpop.f32.mrb[0].mxu0
      %v650 = vadd.f32 %v525, %v649
      %v651 = vpop.f32.mrb[0].mxu0
      %v652 = vpop.f32.mrb[0].mxu0
      %v653 = vadd.f32 %v525, %v652
      %v654 = vpop.f32.mrb[0].mxu0
      %655 = vmatprep.mubr.bf16.mxu0 0
      %656 = vmatmul.mubr.bf16.gmra.mrb[0].mxu0 %v511
      %v657 = vpop.f32.mrb[0].mxu0
      %v658 = vadd.f32 %v525, %v657
      %v659 = vpop.f32.mrb[0].mxu0
      %v660 = vpop.f32.mrb[0].mxu0
      %v661 = vadd.f32 %v525, %v660
      %v662 = vpop.f32.mrb[0].mxu0
      %663 = vmatprep.mubr.bf16.mxu0 0
      %664 = vmatmul.mubr.bf16.gmra.mrb[0].mxu0 %v512
      %v665 = vpop.f32.mrb[0].mxu0
      %v666 = vadd.f32 %v525, %v665
      %v667 = vpop.f32.mrb[0].mxu0
      %v668 = vpop.f32.mrb[0].mxu0
      %v669 = vadd.f32 %v525, %v668
      %v670 = vpop.f32.mrb[0].mxu0
      %671 = vmatprep.mubr.bf16.mxu0 0
      %672 = vmatmul.mubr.bf16.gmra.mrb[0].mxu0 %v513
      %v673 = vpop.f32.mrb[0].mxu0
      %v674 = vadd.f32 %v525, %v673
      %v675 = vpop.f32.mrb[0].mxu0
      %v676 = vpop.f32.mrb[0].mxu0
      %v677 = vadd.f32 %v525, %v676
      %v678 = vpop.f32.mrb[0].mxu0
      %679 = vmatprep.mubr.bf16.mxu0 0
      %680 = vmatmul.mubr.bf16.gmra.mrb[0].mxu0 %v514
      %v681 = vpop.f32.mrb[0].mxu0
      %v682 = vadd.f32 %v525, %v681
      %v683 = vpop.f32.mrb[0].mxu0
      %v684 = vpop.f32.mrb[0].mxu0
      %v685 = vadd.f32 %v525, %v684
      %v686 = vpop.f32.mrb[0].mxu0
      %687 = vmatprep.mubr.bf16.mxu0 0
      %688 = vmatmul.mubr.bf16.gmra.mrb[0].mxu0 %v515
      %v689 = vpop.f32.mrb[0].mxu0
      %v690 = vadd.f32 %v525, %v689
      %v691 = vpop.f32.mrb[0].mxu0
      %v692 = vpop.f32.mrb[0].mxu0
      %v693 = vadd.f32 %v525, %v692
      %v694 = vpop.f32.mrb[0].mxu0
      %695 = vmatprep.mubr.bf16.mxu0 0
      %696 = vmatmul.mubr.bf16.gmra.mrb[0].mxu0 %v516
      %v697 = vpop.f32.mrb[0].mxu0
      %v698 = vadd.f32 %v525, %v697
      %v699 = vpop.f32.mrb[0].mxu0
      %v700 = vpop.f32.mrb[0].mxu0
      %v701 = vadd.f32 %v525, %v700
      %v702 = vpop.f32.mrb[0].mxu0
      %703 = vmatprep.mubr.bf16.mxu0 0
      %704 = vmatmul.mubr.bf16.gmra.mrb[0].mxu0 %v517
      %v705 = vpop.f32.mrb[0].mxu0
      %v706 = vadd.f32 %v525, %v705
      %v707 = vpop.f32.mrb[0].mxu0
      %v708 = vpop.f32.mrb[0].mxu0
      %v709 = vadd.f32 %v525, %v708
      %v710 = vpop.f32.mrb[0].mxu0
      %711 = vmatprep.mubr.bf16.mxu0 0
      %712 = vmatmul.mubr.bf16.gmra.mrb[0].mxu0 %v518
      %v713 = vpop.f32.mrb[0].mxu0
      %v714 = vadd.f32 %v525, %v713
      %v715 = vpop.f32.mrb[0].mxu0
      %v716 = vpop.f32.mrb[0].mxu0
      %v717 = vadd.f32 %v525, %v716
      %v718 = vpop.f32.mrb[0].mxu0
      %719 = vmatprep.mubr.bf16.mxu0 0
      %720 = vmatmul.mubr.bf16.gmra.mrb[0].mxu0 %v519
      %v721 = vpop.f32.mrb[0].mxu0
      %v722 = vadd.f32 %v525, %v721
      %v723 = vpop.f32.mrb[0].mxu0
      %v724 = vpop.f32.mrb[0].mxu0
      %v725 = vadd.f32 %v525, %v724
      %v726 = vpop.f32.mrb[0].mxu0
      %727 = vmatprep.mubr.bf16.mxu0 0
      %728 = vmatmul.mubr.bf16.gmra.mrb[0].mxu0 %v520
      %v729 = vpop.f32.mrb[0].mxu0
      %v730 = vadd.f32 %v525, %v729
      %v731 = vpop.f32.mrb[0].mxu0
      %v732 = vpop.f32.mrb[0].mxu0
      %v733 = vadd.f32 %v525, %v732
      %v734 = vpop.f32.mrb[0].mxu0
      %735 = vdwg.mxu0
      %v736 = vtanh.pop %v610
      %v737 = vtanh.pop %v613
      %v738 = vtanh.pop %v618
      %v739 = vtanh.pop %v621
      %v740 = vtanh.pop %v626
      %v741 = vtanh.pop %v629
      %v742 = vtanh.pop %v634
      %v743 = vtanh.pop %v637
      %v744 = vtanh.pop %v642
      %v745 = vtanh.pop %v645
      %v746 = vtanh.pop %v650
      %v747 = vtanh.pop %v653
      %v748 = vtanh.pop %v658
      %v749 = vtanh.pop %v661
      %v750 = vtanh.pop %v666
      %v751 = vtanh.pop %v669
      %v752 = vtanh.pop %v674
      %v753 = vtanh.pop %v677
      %v754 = vtanh.pop %v682
      %v755 = vtanh.pop %v685
      %v756 = vtanh.pop %v690
      %v757 = vtanh.pop %v693
      %v758 = vtanh.pop %v698
      %v759 = vtanh.pop %v701
      %v760 = vtanh.pop %v706
      %v761 = vtanh.pop %v709
      %v762 = vtanh.pop %v714
      %v763 = vtanh.pop %v717
      %v764 = vtanh.pop %v722
      %v765 = vtanh.pop %v725
      %v766 = vtanh.pop %v730
      %v767 = vtanh.pop %v733
      %v768 = vld [vmem:[%s1 + $0x80] sm:$0xf]
      %v769 = vld [vmem:[%s1 + $0x84] sm:$0xf]
      %v770 = vld [vmem:[%s1 + $0x88] sm:$0xf]
      %v771 = vld [vmem:[%s1 + $0x8c] sm:$0xf]
      %v772 = vld [vmem:[%s1 + $0x90] sm:$0xf]
      %v773 = vld [vmem:[%s1 + $0x94] sm:$0xf]
      %v774 = vld [vmem:[%s1 + $0x98] sm:$0xf]
      %v775 = vld [vmem:[%s1 + $0x9c] sm:$0xf]
      %v776 = vld [vmem:[%s1 + $0xa0] sm:$0xf]
      %v777 = vld [vmem:[%s1 + $0xa4] sm:$0xf]
      %v778 = vld [vmem:[%s1 + $0xa8] sm:$0xf]
      %v779 = vld [vmem:[%s1 + $0xac] sm:$0xf]
      %v780 = vld [vmem:[%s1 + $0xb0] sm:$0xf]
      %v781 = vld [vmem:[%s1 + $0xb4] sm:$0xf]
      %v782 = vld [vmem:[%s1 + $0xb8] sm:$0xf]
      %v783 = vld [vmem:[%s1 + $0xbc] sm:$0xf]
      %s784 = scalar_lea.vmem %s2, 2
      %v785 = vld [vmem:[%s784] sm:$0x1]
      %v786 = vpack.c.bf16 %v737, %v736
      %v787 = vpack.c.bf16 %v739, %v738
      %v788 = vpack.c.bf16 %v741, %v740
      %v789 = vpack.c.bf16 %v743, %v742
      %v790 = vpack.c.bf16 %v745, %v744
      %v791 = vpack.c.bf16 %v747, %v746
      %v792 = vpack.c.bf16 %v749, %v748
      %v793 = vpack.c.bf16 %v751, %v750
      %v794 = vpack.c.bf16 %v753, %v752
      %v795 = vpack.c.bf16 %v755, %v754
      %v796 = vpack.c.bf16 %v757, %v756
      %v797 = vpack.c.bf16 %v759, %v758
      %v798 = vpack.c.bf16 %v761, %v760
      %v799 = vpack.c.bf16 %v763, %v762
      %v800 = vpack.c.bf16 %v765, %v764
      %v801 = vpack.c.bf16 %v767, %v766
      %v803 = vlaneseq
      %v804 = vshrl.u32 %v803, 7
      %v805 = vsub.s32 0, %v804
      %v806 = vrot.slane %v785, %v805
      %v824 = vunpack.c.l.b16 %v768
      %v825 = vunpack.c.l.b16 %v769
      %v826 = vunpack.c.l.b16 %v770
      %v827 = vunpack.c.l.b16 %v771
      %v828 = vunpack.c.l.b16 %v772
      %v829 = vunpack.c.l.b16 %v773
      %v830 = vunpack.c.l.b16 %v774
      %v831 = vunpack.c.l.b16 %v775
      %v832 = vunpack.c.l.b16 %v776
      %v833 = vunpack.c.l.b16 %v777
      %v834 = vunpack.c.l.b16 %v778
      %v835 = vunpack.c.l.b16 %v779
      %v836 = vunpack.c.l.b16 %v780
      %v837 = vunpack.c.l.b16 %v781
      %v838 = vunpack.c.l.b16 %v782
      %v839 = vunpack.c.l.b16 %v783
      %v840 = vpack.c.b16 %v825, %v824
      %v841 = vpack.c.b16 %v827, %v826
      %v842 = vpack.c.b16 %v829, %v828
      %v843 = vpack.c.b16 %v831, %v830
      %v844 = vpack.c.b16 %v833, %v832
      %v845 = vpack.c.b16 %v835, %v834
      %v846 = vpack.c.b16 %v837, %v836
      %v847 = vpack.c.b16 %v839, %v838
      %856 = vmatprep.subr.bf16.mxu0 0
      %857 = vmatpush1.bf16.msra.mxu0 %v840
      %858 = vmatprep.subr.bf16.mxu0 0
      %859 = vmatpush1.bf16.msra.mxu0 %v841
      %860 = vmatprep.subr.bf16.mxu0 0
      %861 = vmatpush1.bf16.msra.mxu0 %v842
      %862 = vmatprep.subr.bf16.mxu0 0
      %863 = vmatpush1.bf16.msra.mxu0 %v843
      %864 = vmatprep.subr.bf16.mxu0 0
      %865 = vmatpush1.bf16.msra.mxu0 %v844
      %866 = vmatprep.subr.bf16.mxu0 0
      %867 = vmatpush1.bf16.msra.mxu0 %v845
      %868 = vmatprep.subr.bf16.mxu0 0
      %869 = vmatpush1.bf16.msra.mxu0 %v846
      %870 = vmatprep.subr.bf16.mxu0 0
      %871 = vmatpush1.bf16.msra.mxu0 %v847
      %872 = vmatprep.subr.bf16.mxu0 0
      %873 = vmatpush1.bf16.msra.mxu0 0
      %874 = vmatprep.subr.bf16.mxu0 0
      %875 = vmatpush1.bf16.msra.mxu0 0
      %876 = vmatprep.subr.bf16.mxu0 0
      %877 = vmatpush1.bf16.msra.mxu0 0
      %878 = vmatprep.subr.bf16.mxu0 0
      %879 = vmatpush1.bf16.msra.mxu0 0
      %880 = vmatprep.subr.bf16.mxu0 0
      %881 = vmatpush1.bf16.msra.mxu0 0
      %882 = vmatprep.subr.bf16.mxu0 0
      %883 = vmatpush1.bf16.msra.mxu0 0
      %884 = vmatprep.subr.bf16.mxu0 0
      %885 = vmatpush1.bf16.msra.mxu0 0
      %886 = vmatprep.subr.bf16.mxu0 0
      %887 = vmatpush1.bf16.msra.mxu0 0
      %888 = vmatprep.mubr.bf16.mxu0 0
      %889 = vmatmul.mubr.bf16.gmra.mrb[0].mxu0 %v786
      %v890 = vpop.f32.mrb[0].mxu0
      %v891 = vadd.f32 %v806, %v890
      %v892 = vpop.f32.mrb[0].mxu0
      %v893 = vpop.f32.mrb[0].mxu0
      %v894 = vadd.f32 %v806, %v893
      %v895 = vpop.f32.mrb[0].mxu0
      %896 = vmatprep.mubr.bf16.mxu0 0
      %897 = vmatmul.mubr.bf16.gmra.mrb[0].mxu0 %v787
      %v898 = vpop.f32.mrb[0].mxu0
      %v899 = vadd.f32 %v806, %v898
      %v900 = vpop.f32.mrb[0].mxu0
      %v901 = vpop.f32.mrb[0].mxu0
      %v902 = vadd.f32 %v806, %v901
      %v903 = vpop.f32.mrb[0].mxu0
      %904 = vmatprep.mubr.bf16.mxu0 0
      %905 = vmatmul.mubr.bf16.gmra.mrb[0].mxu0 %v788
      %v906 = vpop.f32.mrb[0].mxu0
      %v907 = vadd.f32 %v806, %v906
      %v908 = vpop.f32.mrb[0].mxu0
      %v909 = vpop.f32.mrb[0].mxu0
      %v910 = vadd.f32 %v806, %v909
      %v911 = vpop.f32.mrb[0].mxu0
      %912 = vmatprep.mubr.bf16.mxu0 0
      %913 = vmatmul.mubr.bf16.gmra.mrb[0].mxu0 %v789
      %v914 = vpop.f32.mrb[0].mxu0
      %v915 = vadd.f32 %v806, %v914
      %v916 = vpop.f32.mrb[0].mxu0
      %v917 = vpop.f32.mrb[0].mxu0
      %v918 = vadd.f32 %v806, %v917
      %v919 = vpop.f32.mrb[0].mxu0
      %920 = vmatprep.mubr.bf16.mxu0 0
      %921 = vmatmul.mubr.bf16.gmra.mrb[0].mxu0 %v790
      %v922 = vpop.f32.mrb[0].mxu0
      %v923 = vadd.f32 %v806, %v922
      %v924 = vpop.f32.mrb[0].mxu0
      %v925 = vpop.f32.mrb[0].mxu0
      %v926 = vadd.f32 %v806, %v925
      %v927 = vpop.f32.mrb[0].mxu0
      %928 = vmatprep.mubr.bf16.mxu0 0
      %929 = vmatmul.mubr.bf16.gmra.mrb[0].mxu0 %v791
      %v930 = vpop.f32.mrb[0].mxu0
      %v931 = vadd.f32 %v806, %v930
      %v932 = vpop.f32.mrb[0].mxu0
      %v933 = vpop.f32.mrb[0].mxu0
      %v934 = vadd.f32 %v806, %v933
      %v935 = vpop.f32.mrb[0].mxu0
      %936 = vmatprep.mubr.bf16.mxu0 0
      %937 = vmatmul.mubr.bf16.gmra.mrb[0].mxu0 %v792
      %v938 = vpop.f32.mrb[0].mxu0
      %v939 = vadd.f32 %v806, %v938
      %v940 = vpop.f32.mrb[0].mxu0
      %v941 = vpop.f32.mrb[0].mxu0
      %v942 = vadd.f32 %v806, %v941
      %v943 = vpop.f32.mrb[0].mxu0
      %944 = vmatprep.mubr.bf16.mxu0 0
      %945 = vmatmul.mubr.bf16.gmra.mrb[0].mxu0 %v793
      %v946 = vpop.f32.mrb[0].mxu0
      %v947 = vadd.f32 %v806, %v946
      %v948 = vpop.f32.mrb[0].mxu0
      %v949 = vpop.f32.mrb[0].mxu0
      %v950 = vadd.f32 %v806, %v949
      %v951 = vpop.f32.mrb[0].mxu0
      %952 = vmatprep.mubr.bf16.mxu0 0
      %953 = vmatmul.mubr.bf16.gmra.mrb[0].mxu0 %v794
      %v954 = vpop.f32.mrb[0].mxu0
      %v955 = vadd.f32 %v806, %v954
      %v956 = vpop.f32.mrb[0].mxu0
      %v957 = vpop.f32.mrb[0].mxu0
      %v958 = vadd.f32 %v806, %v957
      %v959 = vpop.f32.mrb[0].mxu0
      %960 = vmatprep.mubr.bf16.mxu0 0
      %961 = vmatmul.mubr.bf16.gmra.mrb[0].mxu0 %v795
      %v962 = vpop.f32.mrb[0].mxu0
      %v963 = vadd.f32 %v806, %v962
      %v964 = vpop.f32.mrb[0].mxu0
      %v965 = vpop.f32.mrb[0].mxu0
      %v966 = vadd.f32 %v806, %v965
      %v967 = vpop.f32.mrb[0].mxu0
      %968 = vmatprep.mubr.bf16.mxu0 0
      %969 = vmatmul.mubr.bf16.gmra.mrb[0].mxu0 %v796
      %v970 = vpop.f32.mrb[0].mxu0
      %v971 = vadd.f32 %v806, %v970
      %v972 = vpop.f32.mrb[0].mxu0
      %v973 = vpop.f32.mrb[0].mxu0
      %v974 = vadd.f32 %v806, %v973
      %v975 = vpop.f32.mrb[0].mxu0
      %976 = vmatprep.mubr.bf16.mxu0 0
      %977 = vmatmul.mubr.bf16.gmra.mrb[0].mxu0 %v797
      %v978 = vpop.f32.mrb[0].mxu0
      %v979 = vadd.f32 %v806, %v978
      %v980 = vpop.f32.mrb[0].mxu0
      %v981 = vpop.f32.mrb[0].mxu0
      %v982 = vadd.f32 %v806, %v981
      %v983 = vpop.f32.mrb[0].mxu0
      %984 = vmatprep.mubr.bf16.mxu0 0
      %985 = vmatmul.mubr.bf16.gmra.mrb[0].mxu0 %v798
      %v986 = vpop.f32.mrb[0].mxu0
      %v987 = vadd.f32 %v806, %v986
      %v988 = vpop.f32.mrb[0].mxu0
      %v989 = vpop.f32.mrb[0].mxu0
      %v990 = vadd.f32 %v806, %v989
      %v991 = vpop.f32.mrb[0].mxu0
      %992 = vmatprep.mubr.bf16.mxu0 0
      %993 = vmatmul.mubr.bf16.gmra.mrb[0].mxu0 %v799
      %v994 = vpop.f32.mrb[0].mxu0
      %v995 = vadd.f32 %v806, %v994
      %v996 = vpop.f32.mrb[0].mxu0
      %v997 = vpop.f32.mrb[0].mxu0
      %v998 = vadd.f32 %v806, %v997
      %v999 = vpop.f32.mrb[0].mxu0
      %1000 = vmatprep.mubr.bf16.mxu0 0
      %1001 = vmatmul.mubr.bf16.gmra.mrb[0].mxu0 %v800
      %v1002 = vpop.f32.mrb[0].mxu0
      %v1003 = vadd.f32 %v806, %v1002
      %v1004 = vpop.f32.mrb[0].mxu0
      %v1005 = vpop.f32.mrb[0].mxu0
      %v1006 = vadd.f32 %v806, %v1005
      %v1007 = vpop.f32.mrb[0].mxu0
      %1008 = vmatprep.mubr.bf16.mxu0 0
      %1009 = vmatmul.mubr.bf16.gmra.mrb[0].mxu0 %v801
      %v1010 = vpop.f32.mrb[0].mxu0
      %v1011 = vadd.f32 %v806, %v1010
      %v1012 = vpop.f32.mrb[0].mxu0
      %v1013 = vpop.f32.mrb[0].mxu0
      %v1014 = vadd.f32 %v806, %v1013
      %v1015 = vpop.f32.mrb[0].mxu0
      %1016 = vdwg.mxu0
      %v1017 = vtanh.pop %v891
      %v1018 = vtanh.pop %v894
      %v1019 = vtanh.pop %v899
      %v1020 = vtanh.pop %v902
      %v1021 = vtanh.pop %v907
      %v1022 = vtanh.pop %v910
      %v1023 = vtanh.pop %v915
      %v1024 = vtanh.pop %v918
      %v1025 = vtanh.pop %v923
      %v1026 = vtanh.pop %v926
      %v1027 = vtanh.pop %v931
      %v1028 = vtanh.pop %v934
      %v1029 = vtanh.pop %v939
      %v1030 = vtanh.pop %v942
      %v1031 = vtanh.pop %v947
      %v1032 = vtanh.pop %v950
      %v1033 = vtanh.pop %v955
      %v1034 = vtanh.pop %v958
      %v1035 = vtanh.pop %v963
      %v1036 = vtanh.pop %v966
      %v1037 = vtanh.pop %v971
      %v1038 = vtanh.pop %v974
      %v1039 = vtanh.pop %v979
      %v1040 = vtanh.pop %v982
      %v1041 = vtanh.pop %v987
      %v1042 = vtanh.pop %v990
      %v1043 = vtanh.pop %v995
      %v1044 = vtanh.pop %v998
      %v1045 = vtanh.pop %v1003
      %v1046 = vtanh.pop %v1006
      %v1047 = vtanh.pop %v1011
      %v1048 = vtanh.pop %v1014
      %v1049 = vld [vmem:[%s1 + $0xc0] sm:$0xf]
      %v1050 = vld [vmem:[%s1 + $0xc4] sm:$0xf]
      %v1051 = vld [vmem:[%s1 + $0xc8] sm:$0xf]
      %v1052 = vld [vmem:[%s1 + $0xcc] sm:$0xf]
      %v1053 = vld [vmem:[%s1 + $0xd0] sm:$0xf]
      %v1054 = vld [vmem:[%s1 + $0xd4] sm:$0xf]
      %v1055 = vld [vmem:[%s1 + $0xd8] sm:$0xf]
      %v1056 = vld [vmem:[%s1 + $0xdc] sm:$0xf]
      %v1057 = vld [vmem:[%s1 + $0xe0] sm:$0xf]
      %v1058 = vld [vmem:[%s1 + $0xe4] sm:$0xf]
      %v1059 = vld [vmem:[%s1 + $0xe8] sm:$0xf]
      %v1060 = vld [vmem:[%s1 + $0xec] sm:$0xf]
      %v1061 = vld [vmem:[%s1 + $0xf0] sm:$0xf]
      %v1062 = vld [vmem:[%s1 + $0xf4] sm:$0xf]
      %v1063 = vld [vmem:[%s1 + $0xf8] sm:$0xf]
      %v1064 = vld [vmem:[%s1 + $0xfc] sm:$0xf]
      %s1065 = scalar_lea.vmem %s2, 3
      %v1066 = vld [vmem:[%s1065] sm:$0x1]
      %v1067 = vpack.c.bf16 %v1018, %v1017
      %v1068 = vpack.c.bf16 %v1020, %v1019
      %v1069 = vpack.c.bf16 %v1022, %v1021
      %v1070 = vpack.c.bf16 %v1024, %v1023
      %v1071 = vpack.c.bf16 %v1026, %v1025
      %v1072 = vpack.c.bf16 %v1028, %v1027
      %v1073 = vpack.c.bf16 %v1030, %v1029
      %v1074 = vpack.c.bf16 %v1032, %v1031
      %v1075 = vpack.c.bf16 %v1034, %v1033
      %v1076 = vpack.c.bf16 %v1036, %v1035
      %v1077 = vpack.c.bf16 %v1038, %v1037
      %v1078 = vpack.c.bf16 %v1040, %v1039
      %v1079 = vpack.c.bf16 %v1042, %v1041
      %v1080 = vpack.c.bf16 %v1044, %v1043
      %v1081 = vpack.c.bf16 %v1046, %v1045
      %v1082 = vpack.c.bf16 %v1048, %v1047
      %v1084 = vlaneseq
      %v1085 = vshrl.u32 %v1084, 7
      %v1086 = vsub.s32 0, %v1085
      %v1087 = vrot.slane %v1066, %v1086
      %v1105 = vunpack.c.l.b16 %v1049
      %v1106 = vunpack.c.l.b16 %v1050
      %v1107 = vunpack.c.l.b16 %v1051
      %v1108 = vunpack.c.l.b16 %v1052
      %v1109 = vunpack.c.l.b16 %v1053
      %v1110 = vunpack.c.l.b16 %v1054
      %v1111 = vunpack.c.l.b16 %v1055
      %v1112 = vunpack.c.l.b16 %v1056
      %v1113 = vunpack.c.l.b16 %v1057
      %v1114 = vunpack.c.l.b16 %v1058
      %v1115 = vunpack.c.l.b16 %v1059
      %v1116 = vunpack.c.l.b16 %v1060
      %v1117 = vunpack.c.l.b16 %v1061
      %v1118 = vunpack.c.l.b16 %v1062
      %v1119 = vunpack.c.l.b16 %v1063
      %v1120 = vunpack.c.l.b16 %v1064
      %v1121 = vpack.c.b16 %v1106, %v1105
      %v1122 = vpack.c.b16 %v1108, %v1107
      %v1123 = vpack.c.b16 %v1110, %v1109
      %v1124 = vpack.c.b16 %v1112, %v1111
      %v1125 = vpack.c.b16 %v1114, %v1113
      %v1126 = vpack.c.b16 %v1116, %v1115
      %v1127 = vpack.c.b16 %v1118, %v1117
      %v1128 = vpack.c.b16 %v1120, %v1119
      %1137 = vmatprep.subr.bf16.mxu0 0
      %1138 = vmatpush1.bf16.msra.mxu0 %v1121
      %1139 = vmatprep.subr.bf16.mxu0 0
      %1140 = vmatpush1.bf16.msra.mxu0 %v1122
      %1141 = vmatprep.subr.bf16.mxu0 0
      %1142 = vmatpush1.bf16.msra.mxu0 %v1123
      %1143 = vmatprep.subr.bf16.mxu0 0
      %1144 = vmatpush1.bf16.msra.mxu0 %v1124
      %1145 = vmatprep.subr.bf16.mxu0 0
      %1146 = vmatpush1.bf16.msra.mxu0 %v1125
      %1147 = vmatprep.subr.bf16.mxu0 0
      %1148 = vmatpush1.bf16.msra.mxu0 %v1126
      %1149 = vmatprep.subr.bf16.mxu0 0
      %1150 = vmatpush1.bf16.msra.mxu0 %v1127
      %1151 = vmatprep.subr.bf16.mxu0 0
      %1152 = vmatpush1.bf16.msra.mxu0 %v1128
      %1153 = vmatprep.subr.bf16.mxu0 0
      %1154 = vmatpush1.bf16.msra.mxu0 0
      %1155 = vmatprep.subr.bf16.mxu0 0
      %1156 = vmatpush1.bf16.msra.mxu0 0
      %1157 = vmatprep.subr.bf16.mxu0 0
      %1158 = vmatpush1.bf16.msra.mxu0 0
      %1159 = vmatprep.subr.bf16.mxu0 0
      %1160 = vmatpush1.bf16.msra.mxu0 0
      %1161 = vmatprep.subr.bf16.mxu0 0
      %1162 = vmatpush1.bf16.msra.mxu0 0
      %1163 = vmatprep.subr.bf16.mxu0 0
      %1164 = vmatpush1.bf16.msra.mxu0 0
      %1165 = vmatprep.subr.bf16.mxu0 0
      %1166 = vmatpush1.bf16.msra.mxu0 0
      %1167 = vmatprep.subr.bf16.mxu0 0
      %1168 = vmatpush1.bf16.msra.mxu0 0
      %1169 = vmatprep.mubr.bf16.mxu0 0
      %1170 = vmatmul.mubr.bf16.gmra.mrb[0].mxu0 %v1067
      %v1171 = vpop.f32.mrb[0].mxu0
      %v1172 = vadd.f32 %v1087, %v1171
      %v1173 = vpop.f32.mrb[0].mxu0
      %v1174 = vpop.f32.mrb[0].mxu0
      %v1175 = vadd.f32 %v1087, %v1174
      %v1176 = vpop.f32.mrb[0].mxu0
      %1177 = vmatprep.mubr.bf16.mxu0 0
      %1178 = vmatmul.mubr.bf16.gmra.mrb[0].mxu0 %v1068
      %v1179 = vpop.f32.mrb[0].mxu0
      %v1180 = vadd.f32 %v1087, %v1179
      %v1181 = vpop.f32.mrb[0].mxu0
      %v1182 = vpop.f32.mrb[0].mxu0
      %v1183 = vadd.f32 %v1087, %v1182
      %v1184 = vpop.f32.mrb[0].mxu0
      %1185 = vmatprep.mubr.bf16.mxu0 0
      %1186 = vmatmul.mubr.bf16.gmra.mrb[0].mxu0 %v1069
      %v1187 = vpop.f32.mrb[0].mxu0
      %v1188 = vadd.f32 %v1087, %v1187
      %v1189 = vpop.f32.mrb[0].mxu0
      %v1190 = vpop.f32.mrb[0].mxu0
      %v1191 = vadd.f32 %v1087, %v1190
      %v1192 = vpop.f32.mrb[0].mxu0
      %1193 = vmatprep.mubr.bf16.mxu0 0
      %1194 = vmatmul.mubr.bf16.gmra.mrb[0].mxu0 %v1070
      %v1195 = vpop.f32.mrb[0].mxu0
      %v1196 = vadd.f32 %v1087, %v1195
      %v1197 = vpop.f32.mrb[0].mxu0
      %v1198 = vpop.f32.mrb[0].mxu0
      %v1199 = vadd.f32 %v1087, %v1198
      %v1200 = vpop.f32.mrb[0].mxu0
      %1201 = vmatprep.mubr.bf16.mxu0 0
      %1202 = vmatmul.mubr.bf16.gmra.mrb[0].mxu0 %v1071
      %v1203 = vpop.f32.mrb[0].mxu0
      %v1204 = vadd.f32 %v1087, %v1203
      %v1205 = vpop.f32.mrb[0].mxu0
      %v1206 = vpop.f32.mrb[0].mxu0
      %v1207 = vadd.f32 %v1087, %v1206
      %v1208 = vpop.f32.mrb[0].mxu0
      %1209 = vmatprep.mubr.bf16.mxu0 0
      %1210 = vmatmul.mubr.bf16.gmra.mrb[0].mxu0 %v1072
      %v1211 = vpop.f32.mrb[0].mxu0
      %v1212 = vadd.f32 %v1087, %v1211
      %v1213 = vpop.f32.mrb[0].mxu0
      %v1214 = vpop.f32.mrb[0].mxu0
      %v1215 = vadd.f32 %v1087, %v1214
      %v1216 = vpop.f32.mrb[0].mxu0
      %1217 = vmatprep.mubr.bf16.mxu0 0
      %1218 = vmatmul.mubr.bf16.gmra.mrb[0].mxu0 %v1073
      %v1219 = vpop.f32.mrb[0].mxu0
      %v1220 = vadd.f32 %v1087, %v1219
      %v1221 = vpop.f32.mrb[0].mxu0
      %v1222 = vpop.f32.mrb[0].mxu0
      %v1223 = vadd.f32 %v1087, %v1222
      %v1224 = vpop.f32.mrb[0].mxu0
      %1225 = vmatprep.mubr.bf16.mxu0 0
      %1226 = vmatmul.mubr.bf16.gmra.mrb[0].mxu0 %v1074
      %v1227 = vpop.f32.mrb[0].mxu0
      %v1228 = vadd.f32 %v1087, %v1227
      %v1229 = vpop.f32.mrb[0].mxu0
      %v1230 = vpop.f32.mrb[0].mxu0
      %v1231 = vadd.f32 %v1087, %v1230
      %v1232 = vpop.f32.mrb[0].mxu0
      %1233 = vmatprep.mubr.bf16.mxu0 0
      %1234 = vmatmul.mubr.bf16.gmra.mrb[0].mxu0 %v1075
      %v1235 = vpop.f32.mrb[0].mxu0
      %v1236 = vadd.f32 %v1087, %v1235
      %v1237 = vpop.f32.mrb[0].mxu0
      %v1238 = vpop.f32.mrb[0].mxu0
      %v1239 = vadd.f32 %v1087, %v1238
      %v1240 = vpop.f32.mrb[0].mxu0
      %1241 = vmatprep.mubr.bf16.mxu0 0
      %1242 = vmatmul.mubr.bf16.gmra.mrb[0].mxu0 %v1076
      %v1243 = vpop.f32.mrb[0].mxu0
      %v1244 = vadd.f32 %v1087, %v1243
      %v1245 = vpop.f32.mrb[0].mxu0
      %v1246 = vpop.f32.mrb[0].mxu0
      %v1247 = vadd.f32 %v1087, %v1246
      %v1248 = vpop.f32.mrb[0].mxu0
      %1249 = vmatprep.mubr.bf16.mxu0 0
      %1250 = vmatmul.mubr.bf16.gmra.mrb[0].mxu0 %v1077
      %v1251 = vpop.f32.mrb[0].mxu0
      %v1252 = vadd.f32 %v1087, %v1251
      %v1253 = vpop.f32.mrb[0].mxu0
      %v1254 = vpop.f32.mrb[0].mxu0
      %v1255 = vadd.f32 %v1087, %v1254
      %v1256 = vpop.f32.mrb[0].mxu0
      %1257 = vmatprep.mubr.bf16.mxu0 0
      %1258 = vmatmul.mubr.bf16.gmra.mrb[0].mxu0 %v1078
      %v1259 = vpop.f32.mrb[0].mxu0
      %v1260 = vadd.f32 %v1087, %v1259
      %v1261 = vpop.f32.mrb[0].mxu0
      %v1262 = vpop.f32.mrb[0].mxu0
      %v1263 = vadd.f32 %v1087, %v1262
      %v1264 = vpop.f32.mrb[0].mxu0
      %1265 = vmatprep.mubr.bf16.mxu0 0
      %1266 = vmatmul.mubr.bf16.gmra.mrb[0].mxu0 %v1079
      %v1267 = vpop.f32.mrb[0].mxu0
      %v1268 = vadd.f32 %v1087, %v1267
      %v1269 = vpop.f32.mrb[0].mxu0
      %v1270 = vpop.f32.mrb[0].mxu0
      %v1271 = vadd.f32 %v1087, %v1270
      %v1272 = vpop.f32.mrb[0].mxu0
      %1273 = vmatprep.mubr.bf16.mxu0 0
      %1274 = vmatmul.mubr.bf16.gmra.mrb[0].mxu0 %v1080
      %v1275 = vpop.f32.mrb[0].mxu0
      %v1276 = vadd.f32 %v1087, %v1275
      %v1277 = vpop.f32.mrb[0].mxu0
      %v1278 = vpop.f32.mrb[0].mxu0
      %v1279 = vadd.f32 %v1087, %v1278
      %v1280 = vpop.f32.mrb[0].mxu0
      %1281 = vmatprep.mubr.bf16.mxu0 0
      %1282 = vmatmul.mubr.bf16.gmra.mrb[0].mxu0 %v1081
      %v1283 = vpop.f32.mrb[0].mxu0
      %v1284 = vadd.f32 %v1087, %v1283
      %v1285 = vpop.f32.mrb[0].mxu0
      %v1286 = vpop.f32.mrb[0].mxu0
      %v1287 = vadd.f32 %v1087, %v1286
      %v1288 = vpop.f32.mrb[0].mxu0
      %1289 = vmatprep.mubr.bf16.mxu0 0
      %1290 = vmatmul.mubr.bf16.gmra.mrb[0].mxu0 %v1082
      %v1291 = vpop.f32.mrb[0].mxu0
      %v1292 = vadd.f32 %v1087, %v1291
      %v1293 = vpop.f32.mrb[0].mxu0
      %v1294 = vpop.f32.mrb[0].mxu0
      %v1295 = vadd.f32 %v1087, %v1294
      %v1296 = vpop.f32.mrb[0].mxu0
      %1297 = vdwg.mxu0
      %v1298 = vtanh.pop %v1172
      %v1299 = vtanh.pop %v1175
      %v1300 = vtanh.pop %v1180
      %v1301 = vtanh.pop %v1183
      %v1302 = vtanh.pop %v1188
      %v1303 = vtanh.pop %v1191
      %v1304 = vtanh.pop %v1196
      %v1305 = vtanh.pop %v1199
      %v1306 = vtanh.pop %v1204
      %v1307 = vtanh.pop %v1207
      %v1308 = vtanh.pop %v1212
      %v1309 = vtanh.pop %v1215
      %v1310 = vtanh.pop %v1220
      %v1311 = vtanh.pop %v1223
      %v1312 = vtanh.pop %v1228
      %v1313 = vtanh.pop %v1231
      %v1314 = vtanh.pop %v1236
      %v1315 = vtanh.pop %v1239
      %v1316 = vtanh.pop %v1244
      %v1317 = vtanh.pop %v1247
      %v1318 = vtanh.pop %v1252
      %v1319 = vtanh.pop %v1255
      %v1320 = vtanh.pop %v1260
      %v1321 = vtanh.pop %v1263
      %v1322 = vtanh.pop %v1268
      %v1323 = vtanh.pop %v1271
      %v1324 = vtanh.pop %v1276
      %v1325 = vtanh.pop %v1279
      %v1326 = vtanh.pop %v1284
      %v1327 = vtanh.pop %v1287
      %v1328 = vtanh.pop %v1292
      %v1329 = vtanh.pop %v1295
      %v1330 = vld [vmem:[%s1 + $0x100] sm:$0xf]
      %v1331 = vld [vmem:[%s1 + $0x104] sm:$0xf]
      %v1332 = vld [vmem:[%s1 + $0x108] sm:$0xf]
      %v1333 = vld [vmem:[%s1 + $0x10c] sm:$0xf]
      %v1334 = vld [vmem:[%s1 + $0x110] sm:$0xf]
      %v1335 = vld [vmem:[%s1 + $0x114] sm:$0xf]
      %v1336 = vld [vmem:[%s1 + $0x118] sm:$0xf]
      %v1337 = vld [vmem:[%s1 + $0x11c] sm:$0xf]
      %v1338 = vld [vmem:[%s1 + $0x120] sm:$0xf]
      %v1339 = vld [vmem:[%s1 + $0x124] sm:$0xf]
      %v1340 = vld [vmem:[%s1 + $0x128] sm:$0xf]
      %v1341 = vld [vmem:[%s1 + $0x12c] sm:$0xf]
      %v1342 = vld [vmem:[%s1 + $0x130] sm:$0xf]
      %v1343 = vld [vmem:[%s1 + $0x134] sm:$0xf]
      %v1344 = vld [vmem:[%s1 + $0x138] sm:$0xf]
      %v1345 = vld [vmem:[%s1 + $0x13c] sm:$0xf]
      %s1346 = scalar_lea.vmem %s2, 4
      %v1347 = vld [vmem:[%s1346] sm:$0x1]
      %v1348 = vpack.c.bf16 %v1299, %v1298
      %v1349 = vpack.c.bf16 %v1301, %v1300
      %v1350 = vpack.c.bf16 %v1303, %v1302
      %v1351 = vpack.c.bf16 %v1305, %v1304
      %v1352 = vpack.c.bf16 %v1307, %v1306
      %v1353 = vpack.c.bf16 %v1309, %v1308
      %v1354 = vpack.c.bf16 %v1311, %v1310
      %v1355 = vpack.c.bf16 %v1313, %v1312
      %v1356 = vpack.c.bf16 %v1315, %v1314
      %v1357 = vpack.c.bf16 %v1317, %v1316
      %v1358 = vpack.c.bf16 %v1319, %v1318
      %v1359 = vpack.c.bf16 %v1321, %v1320
      %v1360 = vpack.c.bf16 %v1323, %v1322
      %v1361 = vpack.c.bf16 %v1325, %v1324
      %v1362 = vpack.c.bf16 %v1327, %v1326
      %v1363 = vpack.c.bf16 %v1329, %v1328
      %v1365 = vlaneseq
      %v1366 = vshrl.u32 %v1365, 7
      %v1367 = vsub.s32 0, %v1366
      %v1368 = vrot.slane %v1347, %v1367
      %v1386 = vunpack.c.l.b16 %v1330
      %v1387 = vunpack.c.l.b16 %v1331
      %v1388 = vunpack.c.l.b16 %v1332
      %v1389 = vunpack.c.l.b16 %v1333
      %v1390 = vunpack.c.l.b16 %v1334
      %v1391 = vunpack.c.l.b16 %v1335
      %v1392 = vunpack.c.l.b16 %v1336
      %v1393 = vunpack.c.l.b16 %v1337
      %v1394 = vunpack.c.l.b16 %v1338
      %v1395 = vunpack.c.l.b16 %v1339
      %v1396 = vunpack.c.l.b16 %v1340
      %v1397 = vunpack.c.l.b16 %v1341
      %v1398 = vunpack.c.l.b16 %v1342
      %v1399 = vunpack.c.l.b16 %v1343
      %v1400 = vunpack.c.l.b16 %v1344
      %v1401 = vunpack.c.l.b16 %v1345
      %v1402 = vpack.c.b16 %v1387, %v1386
      %v1403 = vpack.c.b16 %v1389, %v1388
      %v1404 = vpack.c.b16 %v1391, %v1390
      %v1405 = vpack.c.b16 %v1393, %v1392
      %v1406 = vpack.c.b16 %v1395, %v1394
      %v1407 = vpack.c.b16 %v1397, %v1396
      %v1408 = vpack.c.b16 %v1399, %v1398
      %v1409 = vpack.c.b16 %v1401, %v1400
      %1418 = vmatprep.subr.bf16.mxu0 0
      %1419 = vmatpush1.bf16.msra.mxu0 %v1402
      %1420 = vmatprep.subr.bf16.mxu0 0
      %1421 = vmatpush1.bf16.msra.mxu0 %v1403
      %1422 = vmatprep.subr.bf16.mxu0 0
      %1423 = vmatpush1.bf16.msra.mxu0 %v1404
      %1424 = vmatprep.subr.bf16.mxu0 0
      %1425 = vmatpush1.bf16.msra.mxu0 %v1405
      %1426 = vmatprep.subr.bf16.mxu0 0
      %1427 = vmatpush1.bf16.msra.mxu0 %v1406
      %1428 = vmatprep.subr.bf16.mxu0 0
      %1429 = vmatpush1.bf16.msra.mxu0 %v1407
      %1430 = vmatprep.subr.bf16.mxu0 0
      %1431 = vmatpush1.bf16.msra.mxu0 %v1408
      %1432 = vmatprep.subr.bf16.mxu0 0
      %1433 = vmatpush1.bf16.msra.mxu0 %v1409
      %1434 = vmatprep.subr.bf16.mxu0 0
      %1435 = vmatpush1.bf16.msra.mxu0 0
      %1436 = vmatprep.subr.bf16.mxu0 0
      %1437 = vmatpush1.bf16.msra.mxu0 0
      %1438 = vmatprep.subr.bf16.mxu0 0
      %1439 = vmatpush1.bf16.msra.mxu0 0
      %1440 = vmatprep.subr.bf16.mxu0 0
      %1441 = vmatpush1.bf16.msra.mxu0 0
      %1442 = vmatprep.subr.bf16.mxu0 0
      %1443 = vmatpush1.bf16.msra.mxu0 0
      %1444 = vmatprep.subr.bf16.mxu0 0
      %1445 = vmatpush1.bf16.msra.mxu0 0
      %1446 = vmatprep.subr.bf16.mxu0 0
      %1447 = vmatpush1.bf16.msra.mxu0 0
      %1448 = vmatprep.subr.bf16.mxu0 0
      %1449 = vmatpush1.bf16.msra.mxu0 0
      %1450 = vmatprep.mubr.bf16.mxu0 0
      %1451 = vmatmul.mubr.bf16.gmra.mrb[0].mxu0 %v1348
      %v1452 = vpop.f32.mrb[0].mxu0
      %v1453 = vadd.f32 %v1368, %v1452
      %v1454 = vpop.f32.mrb[0].mxu0
      %v1455 = vpop.f32.mrb[0].mxu0
      %v1456 = vadd.f32 %v1368, %v1455
      %v1457 = vpop.f32.mrb[0].mxu0
      %1458 = vmatprep.mubr.bf16.mxu0 0
      %1459 = vmatmul.mubr.bf16.gmra.mrb[0].mxu0 %v1349
      %v1460 = vpop.f32.mrb[0].mxu0
      %v1461 = vadd.f32 %v1368, %v1460
      %v1462 = vpop.f32.mrb[0].mxu0
      %v1463 = vpop.f32.mrb[0].mxu0
      %v1464 = vadd.f32 %v1368, %v1463
      %v1465 = vpop.f32.mrb[0].mxu0
      %1466 = vmatprep.mubr.bf16.mxu0 0
      %1467 = vmatmul.mubr.bf16.gmra.mrb[0].mxu0 %v1350
      %v1468 = vpop.f32.mrb[0].mxu0
      %v1469 = vadd.f32 %v1368, %v1468
      %v1470 = vpop.f32.mrb[0].mxu0
      %v1471 = vpop.f32.mrb[0].mxu0
      %v1472 = vadd.f32 %v1368, %v1471
      %v1473 = vpop.f32.mrb[0].mxu0
      %1474 = vmatprep.mubr.bf16.mxu0 0
      %1475 = vmatmul.mubr.bf16.gmra.mrb[0].mxu0 %v1351
      %v1476 = vpop.f32.mrb[0].mxu0
      %v1477 = vadd.f32 %v1368, %v1476
      %v1478 = vpop.f32.mrb[0].mxu0
      %v1479 = vpop.f32.mrb[0].mxu0
      %v1480 = vadd.f32 %v1368, %v1479
      %v1481 = vpop.f32.mrb[0].mxu0
      %1482 = vmatprep.mubr.bf16.mxu0 0
      %1483 = vmatmul.mubr.bf16.gmra.mrb[0].mxu0 %v1352
      %v1484 = vpop.f32.mrb[0].mxu0
      %v1485 = vadd.f32 %v1368, %v1484
      %v1486 = vpop.f32.mrb[0].mxu0
      %v1487 = vpop.f32.mrb[0].mxu0
      %v1488 = vadd.f32 %v1368, %v1487
      %v1489 = vpop.f32.mrb[0].mxu0
      %1490 = vmatprep.mubr.bf16.mxu0 0
      %1491 = vmatmul.mubr.bf16.gmra.mrb[0].mxu0 %v1353
      %v1492 = vpop.f32.mrb[0].mxu0
      %v1493 = vadd.f32 %v1368, %v1492
      %v1494 = vpop.f32.mrb[0].mxu0
      %v1495 = vpop.f32.mrb[0].mxu0
      %v1496 = vadd.f32 %v1368, %v1495
      %v1497 = vpop.f32.mrb[0].mxu0
      %1498 = vmatprep.mubr.bf16.mxu0 0
      %1499 = vmatmul.mubr.bf16.gmra.mrb[0].mxu0 %v1354
      %v1500 = vpop.f32.mrb[0].mxu0
      %v1501 = vadd.f32 %v1368, %v1500
      %v1502 = vpop.f32.mrb[0].mxu0
      %v1503 = vpop.f32.mrb[0].mxu0
      %v1504 = vadd.f32 %v1368, %v1503
      %v1505 = vpop.f32.mrb[0].mxu0
      %1506 = vmatprep.mubr.bf16.mxu0 0
      %1507 = vmatmul.mubr.bf16.gmra.mrb[0].mxu0 %v1355
      %v1508 = vpop.f32.mrb[0].mxu0
      %v1509 = vadd.f32 %v1368, %v1508
      %v1510 = vpop.f32.mrb[0].mxu0
      %v1511 = vpop.f32.mrb[0].mxu0
      %v1512 = vadd.f32 %v1368, %v1511
      %v1513 = vpop.f32.mrb[0].mxu0
      %1514 = vmatprep.mubr.bf16.mxu0 0
      %1515 = vmatmul.mubr.bf16.gmra.mrb[0].mxu0 %v1356
      %v1516 = vpop.f32.mrb[0].mxu0
      %v1517 = vadd.f32 %v1368, %v1516
      %v1518 = vpop.f32.mrb[0].mxu0
      %v1519 = vpop.f32.mrb[0].mxu0
      %v1520 = vadd.f32 %v1368, %v1519
      %v1521 = vpop.f32.mrb[0].mxu0
      %1522 = vmatprep.mubr.bf16.mxu0 0
      %1523 = vmatmul.mubr.bf16.gmra.mrb[0].mxu0 %v1357
      %v1524 = vpop.f32.mrb[0].mxu0
      %v1525 = vadd.f32 %v1368, %v1524
      %v1526 = vpop.f32.mrb[0].mxu0
      %v1527 = vpop.f32.mrb[0].mxu0
      %v1528 = vadd.f32 %v1368, %v1527
      %v1529 = vpop.f32.mrb[0].mxu0
      %1530 = vmatprep.mubr.bf16.mxu0 0
      %1531 = vmatmul.mubr.bf16.gmra.mrb[0].mxu0 %v1358
      %v1532 = vpop.f32.mrb[0].mxu0
      %v1533 = vadd.f32 %v1368, %v1532
      %v1534 = vpop.f32.mrb[0].mxu0
      %v1535 = vpop.f32.mrb[0].mxu0
      %v1536 = vadd.f32 %v1368, %v1535
      %v1537 = vpop.f32.mrb[0].mxu0
      %1538 = vmatprep.mubr.bf16.mxu0 0
      %1539 = vmatmul.mubr.bf16.gmra.mrb[0].mxu0 %v1359
      %v1540 = vpop.f32.mrb[0].mxu0
      %v1541 = vadd.f32 %v1368, %v1540
      %v1542 = vpop.f32.mrb[0].mxu0
      %v1543 = vpop.f32.mrb[0].mxu0
      %v1544 = vadd.f32 %v1368, %v1543
      %v1545 = vpop.f32.mrb[0].mxu0
      %1546 = vmatprep.mubr.bf16.mxu0 0
      %1547 = vmatmul.mubr.bf16.gmra.mrb[0].mxu0 %v1360
      %v1548 = vpop.f32.mrb[0].mxu0
      %v1549 = vadd.f32 %v1368, %v1548
      %v1550 = vpop.f32.mrb[0].mxu0
      %v1551 = vpop.f32.mrb[0].mxu0
      %v1552 = vadd.f32 %v1368, %v1551
      %v1553 = vpop.f32.mrb[0].mxu0
      %1554 = vmatprep.mubr.bf16.mxu0 0
      %1555 = vmatmul.mubr.bf16.gmra.mrb[0].mxu0 %v1361
      %v1556 = vpop.f32.mrb[0].mxu0
      %v1557 = vadd.f32 %v1368, %v1556
      %v1558 = vpop.f32.mrb[0].mxu0
      %v1559 = vpop.f32.mrb[0].mxu0
      %v1560 = vadd.f32 %v1368, %v1559
      %v1561 = vpop.f32.mrb[0].mxu0
      %1562 = vmatprep.mubr.bf16.mxu0 0
      %1563 = vmatmul.mubr.bf16.gmra.mrb[0].mxu0 %v1362
      %v1564 = vpop.f32.mrb[0].mxu0
      %v1565 = vadd.f32 %v1368, %v1564
      %v1566 = vpop.f32.mrb[0].mxu0
      %v1567 = vpop.f32.mrb[0].mxu0
      %v1568 = vadd.f32 %v1368, %v1567
      %v1569 = vpop.f32.mrb[0].mxu0
      %1570 = vmatprep.mubr.bf16.mxu0 0
      %1571 = vmatmul.mubr.bf16.gmra.mrb[0].mxu0 %v1363
      %v1572 = vpop.f32.mrb[0].mxu0
      %v1573 = vadd.f32 %v1368, %v1572
      %v1574 = vpop.f32.mrb[0].mxu0
      %v1575 = vpop.f32.mrb[0].mxu0
      %v1576 = vadd.f32 %v1368, %v1575
      %v1577 = vpop.f32.mrb[0].mxu0
      %1578 = vdwg.mxu0
      %v1579 = vtanh.pop %v1453
      %v1580 = vtanh.pop %v1456
      %v1581 = vtanh.pop %v1461
      %v1582 = vtanh.pop %v1464
      %v1583 = vtanh.pop %v1469
      %v1584 = vtanh.pop %v1472
      %v1585 = vtanh.pop %v1477
      %v1586 = vtanh.pop %v1480
      %v1587 = vtanh.pop %v1485
      %v1588 = vtanh.pop %v1488
      %v1589 = vtanh.pop %v1493
      %v1590 = vtanh.pop %v1496
      %v1591 = vtanh.pop %v1501
      %v1592 = vtanh.pop %v1504
      %v1593 = vtanh.pop %v1509
      %v1594 = vtanh.pop %v1512
      %v1595 = vtanh.pop %v1517
      %v1596 = vtanh.pop %v1520
      %v1597 = vtanh.pop %v1525
      %v1598 = vtanh.pop %v1528
      %v1599 = vtanh.pop %v1533
      %v1600 = vtanh.pop %v1536
      %v1601 = vtanh.pop %v1541
      %v1602 = vtanh.pop %v1544
      %v1603 = vtanh.pop %v1549
      %v1604 = vtanh.pop %v1552
      %v1605 = vtanh.pop %v1557
      %v1606 = vtanh.pop %v1560
      %v1607 = vtanh.pop %v1565
      %v1608 = vtanh.pop %v1568
      %v1609 = vtanh.pop %v1573
      %v1610 = vtanh.pop %v1576
      %v1611 = vld [vmem:[%s1 + $0x140] sm:$0xf]
      %v1612 = vld [vmem:[%s1 + $0x144] sm:$0xf]
      %v1613 = vld [vmem:[%s1 + $0x148] sm:$0xf]
      %v1614 = vld [vmem:[%s1 + $0x14c] sm:$0xf]
      %v1615 = vld [vmem:[%s1 + $0x150] sm:$0xf]
      %v1616 = vld [vmem:[%s1 + $0x154] sm:$0xf]
      %v1617 = vld [vmem:[%s1 + $0x158] sm:$0xf]
      %v1618 = vld [vmem:[%s1 + $0x15c] sm:$0xf]
      %v1619 = vld [vmem:[%s1 + $0x160] sm:$0xf]
      %v1620 = vld [vmem:[%s1 + $0x164] sm:$0xf]
      %v1621 = vld [vmem:[%s1 + $0x168] sm:$0xf]
      %v1622 = vld [vmem:[%s1 + $0x16c] sm:$0xf]
      %v1623 = vld [vmem:[%s1 + $0x170] sm:$0xf]
      %v1624 = vld [vmem:[%s1 + $0x174] sm:$0xf]
      %v1625 = vld [vmem:[%s1 + $0x178] sm:$0xf]
      %v1626 = vld [vmem:[%s1 + $0x17c] sm:$0xf]
      %s1627 = scalar_lea.vmem %s2, 5
      %v1628 = vld [vmem:[%s1627] sm:$0x1]
      %v1629 = vpack.c.bf16 %v1580, %v1579
      %v1630 = vpack.c.bf16 %v1582, %v1581
      %v1631 = vpack.c.bf16 %v1584, %v1583
      %v1632 = vpack.c.bf16 %v1586, %v1585
      %v1633 = vpack.c.bf16 %v1588, %v1587
      %v1634 = vpack.c.bf16 %v1590, %v1589
      %v1635 = vpack.c.bf16 %v1592, %v1591
      %v1636 = vpack.c.bf16 %v1594, %v1593
      %v1637 = vpack.c.bf16 %v1596, %v1595
      %v1638 = vpack.c.bf16 %v1598, %v1597
      %v1639 = vpack.c.bf16 %v1600, %v1599
      %v1640 = vpack.c.bf16 %v1602, %v1601
      %v1641 = vpack.c.bf16 %v1604, %v1603
      %v1642 = vpack.c.bf16 %v1606, %v1605
      %v1643 = vpack.c.bf16 %v1608, %v1607
      %v1644 = vpack.c.bf16 %v1610, %v1609
      %v1646 = vlaneseq
      %v1647 = vshrl.u32 %v1646, 7
      %v1648 = vsub.s32 0, %v1647
      %v1649 = vrot.slane %v1628, %v1648
      %v1667 = vunpack.c.l.b16 %v1611
      %v1668 = vunpack.c.l.b16 %v1612
      %v1669 = vunpack.c.l.b16 %v1613
      %v1670 = vunpack.c.l.b16 %v1614
      %v1671 = vunpack.c.l.b16 %v1615
      %v1672 = vunpack.c.l.b16 %v1616
      %v1673 = vunpack.c.l.b16 %v1617
      %v1674 = vunpack.c.l.b16 %v1618
      %v1675 = vunpack.c.l.b16 %v1619
      %v1676 = vunpack.c.l.b16 %v1620
      %v1677 = vunpack.c.l.b16 %v1621
      %v1678 = vunpack.c.l.b16 %v1622
      %v1679 = vunpack.c.l.b16 %v1623
      %v1680 = vunpack.c.l.b16 %v1624
      %v1681 = vunpack.c.l.b16 %v1625
      %v1682 = vunpack.c.l.b16 %v1626
      %v1683 = vpack.c.b16 %v1668, %v1667
      %v1684 = vpack.c.b16 %v1670, %v1669
      %v1685 = vpack.c.b16 %v1672, %v1671
      %v1686 = vpack.c.b16 %v1674, %v1673
      %v1687 = vpack.c.b16 %v1676, %v1675
      %v1688 = vpack.c.b16 %v1678, %v1677
      %v1689 = vpack.c.b16 %v1680, %v1679
      %v1690 = vpack.c.b16 %v1682, %v1681
      %1699 = vmatprep.subr.bf16.mxu0 0
      %1700 = vmatpush1.bf16.msra.mxu0 %v1683
      %1701 = vmatprep.subr.bf16.mxu0 0
      %1702 = vmatpush1.bf16.msra.mxu0 %v1684
      %1703 = vmatprep.subr.bf16.mxu0 0
      %1704 = vmatpush1.bf16.msra.mxu0 %v1685
      %1705 = vmatprep.subr.bf16.mxu0 0
      %1706 = vmatpush1.bf16.msra.mxu0 %v1686
      %1707 = vmatprep.subr.bf16.mxu0 0
      %1708 = vmatpush1.bf16.msra.mxu0 %v1687
      %1709 = vmatprep.subr.bf16.mxu0 0
      %1710 = vmatpush1.bf16.msra.mxu0 %v1688
      %1711 = vmatprep.subr.bf16.mxu0 0
      %1712 = vmatpush1.bf16.msra.mxu0 %v1689
      %1713 = vmatprep.subr.bf16.mxu0 0
      %1714 = vmatpush1.bf16.msra.mxu0 %v1690
      %1715 = vmatprep.subr.bf16.mxu0 0
      %1716 = vmatpush1.bf16.msra.mxu0 0
      %1717 = vmatprep.subr.bf16.mxu0 0
      %1718 = vmatpush1.bf16.msra.mxu0 0
      %1719 = vmatprep.subr.bf16.mxu0 0
      %1720 = vmatpush1.bf16.msra.mxu0 0
      %1721 = vmatprep.subr.bf16.mxu0 0
      %1722 = vmatpush1.bf16.msra.mxu0 0
      %1723 = vmatprep.subr.bf16.mxu0 0
      %1724 = vmatpush1.bf16.msra.mxu0 0
      %1725 = vmatprep.subr.bf16.mxu0 0
      %1726 = vmatpush1.bf16.msra.mxu0 0
      %1727 = vmatprep.subr.bf16.mxu0 0
      %1728 = vmatpush1.bf16.msra.mxu0 0
      %1729 = vmatprep.subr.bf16.mxu0 0
      %1730 = vmatpush1.bf16.msra.mxu0 0
      %1731 = vmatprep.mubr.bf16.mxu0 0
      %1732 = vmatmul.mubr.bf16.gmra.mrb[0].mxu0 %v1629
      %v1733 = vpop.f32.mrb[0].mxu0
      %v1734 = vadd.f32 %v1649, %v1733
      %v1735 = vpop.f32.mrb[0].mxu0
      %v1736 = vpop.f32.mrb[0].mxu0
      %v1737 = vadd.f32 %v1649, %v1736
      %v1738 = vpop.f32.mrb[0].mxu0
      %1739 = vmatprep.mubr.bf16.mxu0 0
      %1740 = vmatmul.mubr.bf16.gmra.mrb[0].mxu0 %v1630
      %v1741 = vpop.f32.mrb[0].mxu0
      %v1742 = vadd.f32 %v1649, %v1741
      %v1743 = vpop.f32.mrb[0].mxu0
      %v1744 = vpop.f32.mrb[0].mxu0
      %v1745 = vadd.f32 %v1649, %v1744
      %v1746 = vpop.f32.mrb[0].mxu0
      %1747 = vmatprep.mubr.bf16.mxu0 0
      %1748 = vmatmul.mubr.bf16.gmra.mrb[0].mxu0 %v1631
      %v1749 = vpop.f32.mrb[0].mxu0
      %v1750 = vadd.f32 %v1649, %v1749
      %v1751 = vpop.f32.mrb[0].mxu0
      %v1752 = vpop.f32.mrb[0].mxu0
      %v1753 = vadd.f32 %v1649, %v1752
      %v1754 = vpop.f32.mrb[0].mxu0
      %1755 = vmatprep.mubr.bf16.mxu0 0
      %1756 = vmatmul.mubr.bf16.gmra.mrb[0].mxu0 %v1632
      %v1757 = vpop.f32.mrb[0].mxu0
      %v1758 = vadd.f32 %v1649, %v1757
      %v1759 = vpop.f32.mrb[0].mxu0
      %v1760 = vpop.f32.mrb[0].mxu0
      %v1761 = vadd.f32 %v1649, %v1760
      %v1762 = vpop.f32.mrb[0].mxu0
      %1763 = vmatprep.mubr.bf16.mxu0 0
      %1764 = vmatmul.mubr.bf16.gmra.mrb[0].mxu0 %v1633
      %v1765 = vpop.f32.mrb[0].mxu0
      %v1766 = vadd.f32 %v1649, %v1765
      %v1767 = vpop.f32.mrb[0].mxu0
      %v1768 = vpop.f32.mrb[0].mxu0
      %v1769 = vadd.f32 %v1649, %v1768
      %v1770 = vpop.f32.mrb[0].mxu0
      %1771 = vmatprep.mubr.bf16.mxu0 0
      %1772 = vmatmul.mubr.bf16.gmra.mrb[0].mxu0 %v1634
      %v1773 = vpop.f32.mrb[0].mxu0
      %v1774 = vadd.f32 %v1649, %v1773
      %v1775 = vpop.f32.mrb[0].mxu0
      %v1776 = vpop.f32.mrb[0].mxu0
      %v1777 = vadd.f32 %v1649, %v1776
      %v1778 = vpop.f32.mrb[0].mxu0
      %1779 = vmatprep.mubr.bf16.mxu0 0
      %1780 = vmatmul.mubr.bf16.gmra.mrb[0].mxu0 %v1635
      %v1781 = vpop.f32.mrb[0].mxu0
      %v1782 = vadd.f32 %v1649, %v1781
      %v1783 = vpop.f32.mrb[0].mxu0
      %v1784 = vpop.f32.mrb[0].mxu0
      %v1785 = vadd.f32 %v1649, %v1784
      %v1786 = vpop.f32.mrb[0].mxu0
      %1787 = vmatprep.mubr.bf16.mxu0 0
      %1788 = vmatmul.mubr.bf16.gmra.mrb[0].mxu0 %v1636
      %v1789 = vpop.f32.mrb[0].mxu0
      %v1790 = vadd.f32 %v1649, %v1789
      %v1791 = vpop.f32.mrb[0].mxu0
      %v1792 = vpop.f32.mrb[0].mxu0
      %v1793 = vadd.f32 %v1649, %v1792
      %v1794 = vpop.f32.mrb[0].mxu0
      %1795 = vmatprep.mubr.bf16.mxu0 0
      %1796 = vmatmul.mubr.bf16.gmra.mrb[0].mxu0 %v1637
      %v1797 = vpop.f32.mrb[0].mxu0
      %v1798 = vadd.f32 %v1649, %v1797
      %v1799 = vpop.f32.mrb[0].mxu0
      %v1800 = vpop.f32.mrb[0].mxu0
      %v1801 = vadd.f32 %v1649, %v1800
      %v1802 = vpop.f32.mrb[0].mxu0
      %1803 = vmatprep.mubr.bf16.mxu0 0
      %1804 = vmatmul.mubr.bf16.gmra.mrb[0].mxu0 %v1638
      %v1805 = vpop.f32.mrb[0].mxu0
      %v1806 = vadd.f32 %v1649, %v1805
      %v1807 = vpop.f32.mrb[0].mxu0
      %v1808 = vpop.f32.mrb[0].mxu0
      %v1809 = vadd.f32 %v1649, %v1808
      %v1810 = vpop.f32.mrb[0].mxu0
      %1811 = vmatprep.mubr.bf16.mxu0 0
      %1812 = vmatmul.mubr.bf16.gmra.mrb[0].mxu0 %v1639
      %v1813 = vpop.f32.mrb[0].mxu0
      %v1814 = vadd.f32 %v1649, %v1813
      %v1815 = vpop.f32.mrb[0].mxu0
      %v1816 = vpop.f32.mrb[0].mxu0
      %v1817 = vadd.f32 %v1649, %v1816
      %v1818 = vpop.f32.mrb[0].mxu0
      %1819 = vmatprep.mubr.bf16.mxu0 0
      %1820 = vmatmul.mubr.bf16.gmra.mrb[0].mxu0 %v1640
      %v1821 = vpop.f32.mrb[0].mxu0
      %v1822 = vadd.f32 %v1649, %v1821
      %v1823 = vpop.f32.mrb[0].mxu0
      %v1824 = vpop.f32.mrb[0].mxu0
      %v1825 = vadd.f32 %v1649, %v1824
      %v1826 = vpop.f32.mrb[0].mxu0
      %1827 = vmatprep.mubr.bf16.mxu0 0
      %1828 = vmatmul.mubr.bf16.gmra.mrb[0].mxu0 %v1641
      %v1829 = vpop.f32.mrb[0].mxu0
      %v1830 = vadd.f32 %v1649, %v1829
      %v1831 = vpop.f32.mrb[0].mxu0
      %v1832 = vpop.f32.mrb[0].mxu0
      %v1833 = vadd.f32 %v1649, %v1832
      %v1834 = vpop.f32.mrb[0].mxu0
      %1835 = vmatprep.mubr.bf16.mxu0 0
      %1836 = vmatmul.mubr.bf16.gmra.mrb[0].mxu0 %v1642
      %v1837 = vpop.f32.mrb[0].mxu0
      %v1838 = vadd.f32 %v1649, %v1837
      %v1839 = vpop.f32.mrb[0].mxu0
      %v1840 = vpop.f32.mrb[0].mxu0
      %v1841 = vadd.f32 %v1649, %v1840
      %v1842 = vpop.f32.mrb[0].mxu0
      %1843 = vmatprep.mubr.bf16.mxu0 0
      %1844 = vmatmul.mubr.bf16.gmra.mrb[0].mxu0 %v1643
      %v1845 = vpop.f32.mrb[0].mxu0
      %v1846 = vadd.f32 %v1649, %v1845
      %v1847 = vpop.f32.mrb[0].mxu0
      %v1848 = vpop.f32.mrb[0].mxu0
      %v1849 = vadd.f32 %v1649, %v1848
      %v1850 = vpop.f32.mrb[0].mxu0
      %1851 = vmatprep.mubr.bf16.mxu0 0
      %1852 = vmatmul.mubr.bf16.gmra.mrb[0].mxu0 %v1644
      %v1853 = vpop.f32.mrb[0].mxu0
      %v1854 = vadd.f32 %v1649, %v1853
      %v1855 = vpop.f32.mrb[0].mxu0
      %v1856 = vpop.f32.mrb[0].mxu0
      %v1857 = vadd.f32 %v1649, %v1856
      %v1858 = vpop.f32.mrb[0].mxu0
      %1859 = vdwg.mxu0
      %1860 = vst [vmem:[%s172] sm:$0xff] %v1734
      %1861 = vst [vmem:[%s172 + $0x8] sm:$0xff] %v1737
      %1862 = vst [vmem:[%s172 + $0x10] sm:$0xff] %v1742
      %1863 = vst [vmem:[%s172 + $0x18] sm:$0xff] %v1745
      %1864 = vst [vmem:[%s172 + $0x20] sm:$0xff] %v1750
      %1865 = vst [vmem:[%s172 + $0x28] sm:$0xff] %v1753
      %1866 = vst [vmem:[%s172 + $0x30] sm:$0xff] %v1758
      %1867 = vst [vmem:[%s172 + $0x38] sm:$0xff] %v1761
      %1868 = vst [vmem:[%s172 + $0x40] sm:$0xff] %v1766
      %1869 = vst [vmem:[%s172 + $0x48] sm:$0xff] %v1769
      %1870 = vst [vmem:[%s172 + $0x50] sm:$0xff] %v1774
      %1871 = vst [vmem:[%s172 + $0x58] sm:$0xff] %v1777
      %1872 = vst [vmem:[%s172 + $0x60] sm:$0xff] %v1782
      %1873 = vst [vmem:[%s172 + $0x68] sm:$0xff] %v1785
      %1874 = vst [vmem:[%s172 + $0x70] sm:$0xff] %v1790
      %1875 = vst [vmem:[%s172 + $0x78] sm:$0xff] %v1793
      %1876 = vst [vmem:[%s172 + $0x80] sm:$0xff] %v1798
      %1877 = vst [vmem:[%s172 + $0x88] sm:$0xff] %v1801
      %1878 = vst [vmem:[%s172 + $0x90] sm:$0xff] %v1806
      %1879 = vst [vmem:[%s172 + $0x98] sm:$0xff] %v1809
      %1880 = vst [vmem:[%s172 + $0xa0] sm:$0xff] %v1814
      %1881 = vst [vmem:[%s172 + $0xa8] sm:$0xff] %v1817
      %1882 = vst [vmem:[%s172 + $0xb0] sm:$0xff] %v1822
      %1883 = vst [vmem:[%s172 + $0xb8] sm:$0xff] %v1825
      %1884 = vst [vmem:[%s172 + $0xc0] sm:$0xff] %v1830
      %1885 = vst [vmem:[%s172 + $0xc8] sm:$0xff] %v1833
      %1886 = vst [vmem:[%s172 + $0xd0] sm:$0xff] %v1838
      %1887 = vst [vmem:[%s172 + $0xd8] sm:$0xff] %v1841
      %1888 = vst [vmem:[%s172 + $0xe0] sm:$0xff] %v1846
      %1889 = vst [vmem:[%s172 + $0xe8] sm:$0xff] %v1849
      %1890 = vst [vmem:[%s172 + $0xf0] sm:$0xff] %v1854
      %1891 = vst [vmem:[%s172 + $0xf8] sm:$0xff] %v1857
      %s1892 = smul.u32 32, %s14
      %p1893 = scmp.lt.s32.totalorder %s1892, 63
      %s1894 = scalar_select %p1893, %s1892, 63
      %s1895 = smul.addr %s1894, 8
      %s1896 = scalar_lea.vmem %s3, %s1895
      // Predicated region
      $region33: #{_lambda_.1} parent=31 // pred_check
        %p1897 = pneg %p100
      $region34: #{_lambda_.1} parent=31 // pred_check_branch
        %1899 = sbr.rel (%p1897) target = $region36
      $region35: #{_lambda_.1} parent=31 // pred_region
        %s1900 = smul.u32 32, %s14
      $region36: #{_lambda_.1} parent=31 // pred_fallthru
        _
    $region32: #{_lambda_.1} parent=5 // pred_fallthru
      _
    %p1901 = scmp.le.s32.totalorder 2, %s9
    // Predicated region
    $region37: #{_lambda_.1} parent=5 // pred_check
      %p1902 = pneg %p1901
    $region38: #{_lambda_.1} parent=5 // pred_check_branch
      %1904 = sbr.rel (%p1902) target = $region40
    $region39: #{_lambda_.1} parent=5 // pred_region
      %s1905 = ssub.s32 %s9, 2
      // Predicated region
      $region41: #{_lambda_.1} parent=39 // pred_check
        %p1906 = pneg %p106
      $region42: #{_lambda_.1} parent=39 // pred_check_branch
        %1908 = sbr.rel (%p1906) target = $region44
      $region43: #{_lambda_.1} parent=39 // pred_region
        %s1909 = smul.u32 32, %s15
        %p1910 = scmp.lt.s32.totalorder %s1909, 63
        %s1911 = scalar_select %p1910, %s1909, 63
        %s1912 = smul.addr %s1911, 8
        %s1913 = scalar_lea.vmem %s3, %s1912
      $region44: #{_lambda_.1} parent=39 // pred_fallthru
        _
    $region40: #{_lambda_.1} parent=5 // pred_fallthru
      _
  $region6: #{_lambda_.1} parent=0 // loop_footer
    %s13 = sadd.s32 1, %s9
  $region7: #{_lambda_.1} parent=0 // loop_footer_branch
    %8 = sbr.rel target = $region3
  $region8: #{_lambda_.1} parent=0 // loop_exit
    _

</llo_original>
